<compile_context>
chip_gen: v7x
topology: tpu7x:2x2x1
jax: 0.10.0
libtpu: 0.0.40
codegen_flags: <defaults>
</compile_context>

<pallas_src>
import functools

import numpy as np
import jax
import jax.numpy as jnp
from jax import lax
from jax.experimental import pallas as pl
from jax.experimental.pallas import tpu as pltpu

BN_EPS = 1e-5


# ---------------------------------------------------------------------------
# Host-side helpers (pure XLA / numpy, outside the Pallas kernel)
# ---------------------------------------------------------------------------
def _out_hw(h, w):
    """Output spatial size of a 3x3 / stride-2 / pad-1 conv."""
    return (h - 1) // 2 + 1, (w - 1) // 2 + 1


def _im2col_s2k3p1(x_nchw):
    """im2col for a 3x3/s2/p1 conv, done with 9 strided slices on the host side.

    Returns p[(n*ho*wo), 9*cin] bf16 with column layout (tap-major, channel-minor),
    tap t = di*3 + dj, rows (batch, oh, ow)-major.
    """
    n, c, h, w = x_nchw.shape
    ho, wo = _out_hw(h, w)
    x = jnp.transpose(x_nchw, (0, 2, 3, 1))                    # NHWC
    xp = jnp.pad(x, ((0, 0), (1, 1), (1, 1), (0, 0)))
    taps = []
    for di in range(3):
        for dj in range(3):
            taps.append(xp[:, di:di + 2 * ho - 1:2, dj:dj + 2 * wo - 1:2, :])
    p = jnp.concatenate(taps, axis=-1).reshape(n * ho * wo, 9 * c)
    return p.astype(jnp.bfloat16), ho, wo


def _build_select_s2k3p1(n, hin, win):
    """0/1 row-selection matrices for a 3x3/s2/p1 conv (gather-as-matmul).

    s[9, n*hout*wout, n*hin*win]; out-of-bounds taps -> all-zero row (= zero pad).
    Only used for conv2, whose input lives in VMEM.
    """
    hout, wout = _out_hw(hin, win)
    s = np.zeros((9, n * hout * wout, n * hin * win), np.float32)
    for di in range(3):
        for dj in range(3):
            t = di * 3 + dj
            for b in range(n):
                for oh in range(hout):
                    ih = 2 * oh + di - 1
                    if ih < 0 or ih >= hin:
                        continue
                    for ow in range(wout):
                        iw = 2 * ow + dj - 1
                        if iw < 0 or iw >= win:
                            continue
                        s[t, (b * hout + oh) * wout + ow,
                          (b * hin + ih) * win + iw] = 1.0
    return s, hout, wout


def make_constants(n, h, w, inplanes):
    """Shape-dependent constants, built ONCE outside jit and passed as inputs."""
    if inplanes != 16:
        return None
    ho1, wo1 = _out_hw(h, w)
    sel2, _, _ = _build_select_s2k3p1(n, ho1, wo1)
    return {"sel2": jnp.asarray(sel2, jnp.bfloat16)}


# ---------------------------------------------------------------------------
# Pallas kernels (whole head fused, all intermediates stay in VMEM/vregs)
# ---------------------------------------------------------------------------
def _bn_relu(acc, g, b):
    """Training-mode BatchNorm (two-pass batch stats over rows) + ReLU, f32."""
    mean = jnp.mean(acc, axis=0, keepdims=True)
    centered = acc - mean
    var = jnp.mean(centered * centered, axis=0, keepdims=True)
    x_hat = centered * lax.rsqrt(var + BN_EPS)
    return jnp.maximum(x_hat * g + b, 0.0)


def _head2_kernel(p1_ref, w1_ref, g1_ref, b1_ref,
                  s2_ref, w2_ref, g2_ref, b2_ref,
                  wfc_ref, bfc_ref, o_ref, *, n, s_last):
    """inplanes=16 head: conv-BN-ReLU, conv-BN-ReLU, avgpool, fc."""
    # conv1: one fused matmul over the host-built patch slab.
    acc1 = jnp.dot(p1_ref[...], w1_ref[...], preferred_element_type=jnp.float32)
    y1 = _bn_relu(acc1, g1_ref[...], b1_ref[...]).astype(jnp.bfloat16)

    # conv2: 9 row-gathers (exact copies, bf16-lossless) concatenated along K,
    # then ONE [M2, 9*C1] x [9*C1, C2] matmul.
    taps = [
        jnp.dot(s2_ref[t], y1,
                preferred_element_type=jnp.float32).astype(jnp.bfloat16)
        for t in range(9)
    ]
    p2 = jnp.concatenate(taps, axis=-1)
    acc2 = jnp.dot(p2, w2_ref[...], preferred_element_type=jnp.float32)
    y2 = _bn_relu(acc2, g2_ref[...], b2_ref[...])

    # Global average pool: reshape + spatial mean (no pooling matmul).
    c_last = y2.shape[-1]
    pooled = jnp.mean(y2.reshape(n, s_last, c_last), axis=1)

    # Final Linear (bf16 operands, f32 accumulate).
    o_ref[...] = (jnp.dot(pooled.astype(jnp.bfloat16), wfc_ref[...],
                          preferred_element_type=jnp.float32) + bfc_ref[...])


def _head1_kernel(p1_ref, w1_ref, g1_ref, b1_ref,
                  wfc_ref, bfc_ref, o_ref, *, n, s_last):
    """inplanes=32 head: conv-BN-ReLU, avgpool, fc (no selection matrices)."""
    acc1 = jnp.dot(p1_ref[...], w1_ref[...], preferred_element_type=jnp.float32)
    y1 = _bn_relu(acc1, g1_ref[...], b1_ref[...])
    c_last = y1.shape[-1]
    pooled = jnp.mean(y1.reshape(n, s_last, c_last), axis=1)
    o_ref[...] = (jnp.dot(pooled.astype(jnp.bfloat16), wfc_ref[...],
                          preferred_element_type=jnp.float32) + bfc_ref[...])


def _vmem_spec():
    return pl.BlockSpec(memory_space=pltpu.MemorySpace.VMEM)


# ---------------------------------------------------------------------------
# Forward pass (mirrors AuxClassifierNew.forward)
# ---------------------------------------------------------------------------
@functools.partial(jax.jit, static_argnames=("inplanes",))
def aux_classifier_forward(x_nchw, params, consts, inplanes):
    assert inplanes in (16, 32)
    n, cin, h, w = x_nchw.shape
    assert cin == inplanes

    # Host-side glue: im2col patch slab for conv1 (tiny, ~36 KiB bf16).
    p1, ho1, wo1 = _im2col_s2k3p1(x_nchw)
    m1 = n * ho1 * wo1
    c1 = params["w1"].shape[1]
    num_classes = params["w_fc"].shape[1]

    if inplanes == 16:
        sel2 = consts["sel2"]
        c2 = params["w2"].shape[1]
        ho2, wo2 = _out_hw(ho1, wo1)
        m2 = n * ho2 * wo2
        s_last, c_last = ho2 * wo2, c2
        kernel = functools.partial(_head2_kernel, n=n, s_last=s_last)
        inputs = (p1, params["w1"], params["g1"], params["b1"],
                  sel2, params["w2"], params["g2"], params["b2"],
                  params["w_fc"], params["b_fc"])
        flops = 2 * (m1 * 9 * cin * c1          # conv1 matmul
                     + 9 * m2 * m1 * c1         # conv2 row gathers
                     + m2 * 9 * c1 * c2         # conv2 matmul
                     + n * c2 * num_classes)    # fc
    else:
        s_last, c_last = ho1 * wo1, c1
        kernel = functools.partial(_head1_kernel, n=n, s_last=s_last)
        inputs = (p1, params["w1"], params["g1"], params["b1"],
                  params["w_fc"], params["b_fc"])
        flops = 2 * (m1 * 9 * cin * c1 + n * c1 * num_classes)

    bytes_accessed = int(
        sum(int(np.prod(a.shape)) * a.dtype.itemsize for a in inputs)
        + n * num_classes * 4)

    return pl.pallas_call(
        kernel,
        out_shape=jax.ShapeDtypeStruct((n, num_classes), jnp.float32),
        in_specs=[_vmem_spec() for _ in inputs],
        out_specs=_vmem_spec(),
        cost_estimate=pl.CostEstimate(flops=int(flops),
                                      transcendentals=int(2 * c_last),
                                      bytes_accessed=bytes_accessed),
    )(*inputs)


# ---------------------------------------------------------------------------
# Parameter construction (deterministic, synthetic)
# ---------------------------------------------------------------------------
def make_params(key, inplanes=16, class_num=10, widen=1):
    assert inplanes in (16, 32)
    p = {}
    if inplanes == 16:
        c1, c2 = int(32 * widen), int(64 * widen)
        k0, k1, k2, k3 = jax.random.split(key, 4)
        # conv weights stored flattened [9*Cin, Cout] (tap-major rows), bf16.
        p["w1"] = (jax.random.normal(k0, (9 * 16, c1), jnp.float32)
                   / np.sqrt(9.0 * 16.0)).astype(jnp.bfloat16)
        p["g1"] = jnp.ones((1, c1), jnp.float32)
        p["b1"] = jnp.zeros((1, c1), jnp.float32)
        p["w2"] = (jax.random.normal(k1, (9 * c1, c2), jnp.float32)
                   / np.sqrt(9.0 * c1)).astype(jnp.bfloat16)
        p["g2"] = jnp.ones((1, c2), jnp.float32)
        p["b2"] = jnp.zeros((1, c2), jnp.float32)
        c_last = c2
    else:
        c1 = int(64 * widen)
        k0, k2, k3 = jax.random.split(key, 3)
        p["w1"] = (jax.random.normal(k0, (9 * 32, c1), jnp.float32)
                   / np.sqrt(9.0 * 32.0)).astype(jnp.bfloat16)
        p["g1"] = jnp.ones((1, c1), jnp.float32)
        p["b1"] = jnp.zeros((1, c1), jnp.float32)
        c_last = c1
    p["w_fc"] = (jax.random.normal(k2, (c_last, class_num), jnp.float32)
                 / np.sqrt(float(c_last))).astype(jnp.bfloat16)
    p["b_fc"] = 0.01 * jax.random.normal(k3, (1, class_num), jnp.float32)
    return p


# ---------------------------------------------------------------------------
# Pure-JAX f32 reference (tolerance check against the bf16 kernel)
# ---------------------------------------------------------------------------
def _flat_to_oihw(w_flat, cin):
    cout = w_flat.shape[1]
    w = w_flat.astype(jnp.float32).reshape(3, 3, cin, cout)
    return jnp.transpose(w, (3, 2, 0, 1))


def reference_forward(x_nchw, params, inplanes):
    x = x_nchw.astype(jnp.float32)

    def conv_bn_relu_ref(x, w_flat, g, b):
        cin = x.shape[1]
        w = _flat_to_oihw(w_flat, cin)
        y = lax.conv_general_dilated(
            x, w, window_strides=(2, 2), padding=((1, 1), (1, 1)),
            dimension_numbers=("NCHW", "OIHW", "NCHW"),
            precision=lax.Precision.HIGHEST)
        mean = jnp.mean(y, axis=(0, 2, 3), keepdims=True)
        var = jnp.mean((y - mean) ** 2, axis=(0, 2, 3), keepdims=True)
        y_hat = (y - mean) * lax.rsqrt(var + BN_EPS)
        return jnp.maximum(
            y_hat * g.reshape(1, -1, 1, 1) + b.reshape(1, -1, 1, 1), 0.0)

    y = conv_bn_relu_ref(x, params["w1"], params["g1"], params["b1"])
    if inplanes == 16:
        y = conv_bn_relu_ref(y, params["w2"], params["g2"], params["b2"])
    pooled = jnp.mean(y, axis=(2, 3))
    return pooled @ params["w_fc"].astype(jnp.float32) + params["b_fc"]


if __name__ == "__main__":
    key = jax.random.PRNGKey(0)
    k_param, k_in = jax.random.split(key)

    for inplanes in (16, 32):
        params = make_params(k_param, inplanes=inplanes, class_num=10, widen=1)
        x = jax.random.normal(k_in, (2, inplanes, 16, 16), jnp.float32)
        consts = make_constants(2, 16, 16, inplanes)

        out = jax.block_until_ready(
            aux_classifier_forward(x, params, consts, inplanes))
        assert out.shape == (2, 10) and out.dtype == jnp.float32

        ref = jax.block_until_ready(reference_forward(x, params, inplanes))
        err = float(jnp.max(jnp.abs(out - ref)))
        assert err < 5e-2, f"inplanes={inplanes}: max abs err {err}"

    print("KERNEL_OK")
</pallas_src>

<mosaic_0001>
module attributes {stable_mosaic.version = 11 : i64} {
  func.func @_head2_kernel(%arg0: memref<128x144xbf16, #tpu.memory_space<vmem>>, %arg1: memref<144x32xbf16, #tpu.memory_space<vmem>>, %arg2: memref<1x32xf32, #tpu.memory_space<vmem>>, %arg3: memref<1x32xf32, #tpu.memory_space<vmem>>, %arg4: memref<9x32x128xbf16, #tpu.memory_space<vmem>>, %arg5: memref<288x64xbf16, #tpu.memory_space<vmem>>, %arg6: memref<1x64xf32, #tpu.memory_space<vmem>>, %arg7: memref<1x64xf32, #tpu.memory_space<vmem>>, %arg8: memref<64x10xbf16, #tpu.memory_space<vmem>>, %arg9: memref<1x10xf32, #tpu.memory_space<vmem>>, %arg10: memref<2x10xf32, #tpu.memory_space<vmem>>) attributes {dimension_semantics = [], scalar_prefetch = 0 : i64, scratch_operands = 0 : i64, tpu.core_type = #tpu.core_type<tc>} {
    %c0 = arith.constant 0 : index
    %c0_0 = arith.constant 0 : index
    %0 = vector.load %arg0[%c0, %c0_0] : memref<128x144xbf16, #tpu.memory_space<vmem>>, vector<128x144xbf16>
    %c0_1 = arith.constant 0 : index
    %c0_2 = arith.constant 0 : index
    %1 = vector.load %arg1[%c0_1, %c0_2] : memref<144x32xbf16, #tpu.memory_space<vmem>>, vector<144x32xbf16>
    %cst = arith.constant dense<0.000000e+00> : vector<128x32xf32>
    %2 = tpu.matmul %0, %1, %cst {dimension_numbers = #tpu.dot_dimension_numbers<[1], [0], [0], [1], [0, 0, 1, 1], [], []>} : vector<128x144xbf16>, vector<144x32xbf16>, vector<128x32xf32> -> vector<128x32xf32>
    %c0_3 = arith.constant 0 : index
    %c0_4 = arith.constant 0 : index
    %3 = vector.load %arg2[%c0_3, %c0_4] : memref<1x32xf32, #tpu.memory_space<vmem>>, vector<1x32xf32>
    %c0_5 = arith.constant 0 : index
    %c0_6 = arith.constant 0 : index
    %4 = vector.load %arg3[%c0_5, %c0_6] : memref<1x32xf32, #tpu.memory_space<vmem>>, vector<1x32xf32>
    %cst_7 = arith.constant dense<0.000000e+00> : vector<32xf32>
    %5 = vector.multi_reduction <add>, %2, %cst_7 [0] : vector<128x32xf32> to vector<32xf32>
    %6 = vector.shape_cast %5 : vector<32xf32> to vector<1x32xf32>
    %cst_8 = arith.constant 1.280000e+02 : f32
    %7 = vector.broadcast %cst_8 : f32 to vector<1x32xf32>
    %8 = arith.divf %6, %7 : vector<1x32xf32>
    %9 = vector.broadcast %8 : vector<1x32xf32> to vector<128x32xf32>
    %10 = arith.subf %2, %9 : vector<128x32xf32>
    %11 = arith.mulf %10, %10 : vector<128x32xf32>
    %cst_9 = arith.constant dense<0.000000e+00> : vector<32xf32>
    %12 = vector.multi_reduction <add>, %11, %cst_9 [0] : vector<128x32xf32> to vector<32xf32>
    %13 = vector.shape_cast %12 : vector<32xf32> to vector<1x32xf32>
    %cst_10 = arith.constant 1.280000e+02 : f32
    %14 = vector.broadcast %cst_10 : f32 to vector<1x32xf32>
    %15 = arith.divf %13, %14 : vector<1x32xf32>
    %cst_11 = arith.constant 9.99999974E-6 : f32
    %16 = vector.broadcast %cst_11 : f32 to vector<1x32xf32>
    %17 = arith.addf %15, %16 : vector<1x32xf32>
    %18 = math.rsqrt %17 : vector<1x32xf32>
    %19 = vector.broadcast %18 : vector<1x32xf32> to vector<128x32xf32>
    %20 = arith.mulf %10, %19 : vector<128x32xf32>
    %21 = vector.broadcast %3 : vector<1x32xf32> to vector<128x32xf32>
    %22 = arith.mulf %20, %21 : vector<128x32xf32>
    %23 = vector.broadcast %4 : vector<1x32xf32> to vector<128x32xf32>
    %24 = arith.addf %22, %23 : vector<128x32xf32>
    %cst_12 = arith.constant 0.000000e+00 : f32
    %25 = vector.broadcast %cst_12 : f32 to vector<128x32xf32>
    %26 = arith.maximumf %24, %25 : vector<128x32xf32>
    %27 = arith.truncf %26 : vector<128x32xf32> to vector<128x32xbf16>
    %c0_13 = arith.constant 0 : index
    %c0_14 = arith.constant 0 : index
    %c0_15 = arith.constant 0 : index
    %28 = vector.load %arg4[%c0_13, %c0_14, %c0_15] : memref<9x32x128xbf16, #tpu.memory_space<vmem>>, vector<1x32x128xbf16>
    %29 = vector.shape_cast %28 : vector<1x32x128xbf16> to vector<32x128xbf16>
    %cst_16 = arith.constant dense<0.000000e+00> : vector<32x32xf32>
    %30 = tpu.matmul %29, %27, %cst_16 {dimension_numbers = #tpu.dot_dimension_numbers<[1], [0], [0], [1], [0, 0, 1, 1], [], []>} : vector<32x128xbf16>, vector<128x32xbf16>, vector<32x32xf32> -> vector<32x32xf32>
    %31 = arith.truncf %30 : vector<32x32xf32> to vector<32x32xbf16>
    %c1 = arith.constant 1 : index
    %c0_17 = arith.constant 0 : index
    %c0_18 = arith.constant 0 : index
    %32 = vector.load %arg4[%c1, %c0_17, %c0_18] : memref<9x32x128xbf16, #tpu.memory_space<vmem>>, vector<1x32x128xbf16>
    %33 = vector.shape_cast %32 : vector<1x32x128xbf16> to vector<32x128xbf16>
    %cst_19 = arith.constant dense<0.000000e+00> : vector<32x32xf32>
    %34 = tpu.matmul %33, %27, %cst_19 {dimension_numbers = #tpu.dot_dimension_numbers<[1], [0], [0], [1], [0, 0, 1, 1], [], []>} : vector<32x128xbf16>, vector<128x32xbf16>, vector<32x32xf32> -> vector<32x32xf32>
    %35 = arith.truncf %34 : vector<32x32xf32> to vector<32x32xbf16>
    %c2 = arith.constant 2 : index
    %c0_20 = arith.constant 0 : index
    %c0_21 = arith.constant 0 : index
    %36 = vector.load %arg4[%c2, %c0_20, %c0_21] : memref<9x32x128xbf16, #tpu.memory_space<vmem>>, vector<1x32x128xbf16>
    %37 = vector.shape_cast %36 : vector<1x32x128xbf16> to vector<32x128xbf16>
    %cst_22 = arith.constant dense<0.000000e+00> : vector<32x32xf32>
    %38 = tpu.matmul %37, %27, %cst_22 {dimension_numbers = #tpu.dot_dimension_numbers<[1], [0], [0], [1], [0, 0, 1, 1], [], []>} : vector<32x128xbf16>, vector<128x32xbf16>, vector<32x32xf32> -> vector<32x32xf32>
    %39 = arith.truncf %38 : vector<32x32xf32> to vector<32x32xbf16>
    %c3 = arith.constant 3 : index
    %c0_23 = arith.constant 0 : index
    %c0_24 = arith.constant 0 : index
    %40 = vector.load %arg4[%c3, %c0_23, %c0_24] : memref<9x32x128xbf16, #tpu.memory_space<vmem>>, vector<1x32x128xbf16>
    %41 = vector.shape_cast %40 : vector<1x32x128xbf16> to vector<32x128xbf16>
    %cst_25 = arith.constant dense<0.000000e+00> : vector<32x32xf32>
    %42 = tpu.matmul %41, %27, %cst_25 {dimension_numbers = #tpu.dot_dimension_numbers<[1], [0], [0], [1], [0, 0, 1, 1], [], []>} : vector<32x128xbf16>, vector<128x32xbf16>, vector<32x32xf32> -> vector<32x32xf32>
    %43 = arith.truncf %42 : vector<32x32xf32> to vector<32x32xbf16>
    %c4 = arith.constant 4 : index
    %c0_26 = arith.constant 0 : index
    %c0_27 = arith.constant 0 : index
    %44 = vector.load %arg4[%c4, %c0_26, %c0_27] : memref<9x32x128xbf16, #tpu.memory_space<vmem>>, vector<1x32x128xbf16>
    %45 = vector.shape_cast %44 : vector<1x32x128xbf16> to vector<32x128xbf16>
    %cst_28 = arith.constant dense<0.000000e+00> : vector<32x32xf32>
    %46 = tpu.matmul %45, %27, %cst_28 {dimension_numbers = #tpu.dot_dimension_numbers<[1], [0], [0], [1], [0, 0, 1, 1], [], []>} : vector<32x128xbf16>, vector<128x32xbf16>, vector<32x32xf32> -> vector<32x32xf32>
    %47 = arith.truncf %46 : vector<32x32xf32> to vector<32x32xbf16>
    %c5 = arith.constant 5 : index
    %c0_29 = arith.constant 0 : index
    %c0_30 = arith.constant 0 : index
    %48 = vector.load %arg4[%c5, %c0_29, %c0_30] : memref<9x32x128xbf16, #tpu.memory_space<vmem>>, vector<1x32x128xbf16>
    %49 = vector.shape_cast %48 : vector<1x32x128xbf16> to vector<32x128xbf16>
    %cst_31 = arith.constant dense<0.000000e+00> : vector<32x32xf32>
    %50 = tpu.matmul %49, %27, %cst_31 {dimension_numbers = #tpu.dot_dimension_numbers<[1], [0], [0], [1], [0, 0, 1, 1], [], []>} : vector<32x128xbf16>, vector<128x32xbf16>, vector<32x32xf32> -> vector<32x32xf32>
    %51 = arith.truncf %50 : vector<32x32xf32> to vector<32x32xbf16>
    %c6 = arith.constant 6 : index
    %c0_32 = arith.constant 0 : index
    %c0_33 = arith.constant 0 : index
    %52 = vector.load %arg4[%c6, %c0_32, %c0_33] : memref<9x32x128xbf16, #tpu.memory_space<vmem>>, vector<1x32x128xbf16>
    %53 = vector.shape_cast %52 : vector<1x32x128xbf16> to vector<32x128xbf16>
    %cst_34 = arith.constant dense<0.000000e+00> : vector<32x32xf32>
    %54 = tpu.matmul %53, %27, %cst_34 {dimension_numbers = #tpu.dot_dimension_numbers<[1], [0], [0], [1], [0, 0, 1, 1], [], []>} : vector<32x128xbf16>, vector<128x32xbf16>, vector<32x32xf32> -> vector<32x32xf32>
    %55 = arith.truncf %54 : vector<32x32xf32> to vector<32x32xbf16>
    %c7 = arith.constant 7 : index
    %c0_35 = arith.constant 0 : index
    %c0_36 = arith.constant 0 : index
    %56 = vector.load %arg4[%c7, %c0_35, %c0_36] : memref<9x32x128xbf16, #tpu.memory_space<vmem>>, vector<1x32x128xbf16>
    %57 = vector.shape_cast %56 : vector<1x32x128xbf16> to vector<32x128xbf16>
    %cst_37 = arith.constant dense<0.000000e+00> : vector<32x32xf32>
    %58 = tpu.matmul %57, %27, %cst_37 {dimension_numbers = #tpu.dot_dimension_numbers<[1], [0], [0], [1], [0, 0, 1, 1], [], []>} : vector<32x128xbf16>, vector<128x32xbf16>, vector<32x32xf32> -> vector<32x32xf32>
    %59 = arith.truncf %58 : vector<32x32xf32> to vector<32x32xbf16>
    %c8 = arith.constant 8 : index
    %c0_38 = arith.constant 0 : index
    %c0_39 = arith.constant 0 : index
    %60 = vector.load %arg4[%c8, %c0_38, %c0_39] : memref<9x32x128xbf16, #tpu.memory_space<vmem>>, vector<1x32x128xbf16>
    %61 = vector.shape_cast %60 : vector<1x32x128xbf16> to vector<32x128xbf16>
    %cst_40 = arith.constant dense<0.000000e+00> : vector<32x32xf32>
    %62 = tpu.matmul %61, %27, %cst_40 {dimension_numbers = #tpu.dot_dimension_numbers<[1], [0], [0], [1], [0, 0, 1, 1], [], []>} : vector<32x128xbf16>, vector<128x32xbf16>, vector<32x32xf32> -> vector<32x32xf32>
    %63 = arith.truncf %62 : vector<32x32xf32> to vector<32x32xbf16>
    %64 = tpu.concatenate %31, %35, %39, %43, %47, %51, %55, %59, %63 in 1 : vector<32x32xbf16>, vector<32x32xbf16>, vector<32x32xbf16>, vector<32x32xbf16>, vector<32x32xbf16>, vector<32x32xbf16>, vector<32x32xbf16>, vector<32x32xbf16>, vector<32x32xbf16> -> vector<32x288xbf16>
    %c0_41 = arith.constant 0 : index
    %c0_42 = arith.constant 0 : index
    %65 = vector.load %arg5[%c0_41, %c0_42] : memref<288x64xbf16, #tpu.memory_space<vmem>>, vector<288x64xbf16>
    %cst_43 = arith.constant dense<0.000000e+00> : vector<32x64xf32>
    %66 = tpu.matmul %64, %65, %cst_43 {dimension_numbers = #tpu.dot_dimension_numbers<[1], [0], [0], [1], [0, 0, 1, 1], [], []>} : vector<32x288xbf16>, vector<288x64xbf16>, vector<32x64xf32> -> vector<32x64xf32>
    %c0_44 = arith.constant 0 : index
    %c0_45 = arith.constant 0 : index
    %67 = vector.load %arg6[%c0_44, %c0_45] : memref<1x64xf32, #tpu.memory_space<vmem>>, vector<1x64xf32>
    %c0_46 = arith.constant 0 : index
    %c0_47 = arith.constant 0 : index
    %68 = vector.load %arg7[%c0_46, %c0_47] : memref<1x64xf32, #tpu.memory_space<vmem>>, vector<1x64xf32>
    %cst_48 = arith.constant dense<0.000000e+00> : vector<64xf32>
    %69 = vector.multi_reduction <add>, %66, %cst_48 [0] : vector<32x64xf32> to vector<64xf32>
    %70 = vector.shape_cast %69 : vector<64xf32> to vector<1x64xf32>
    %cst_49 = arith.constant 3.200000e+01 : f32
    %71 = vector.broadcast %cst_49 : f32 to vector<1x64xf32>
    %72 = arith.divf %70, %71 : vector<1x64xf32>
    %73 = vector.broadcast %72 : vector<1x64xf32> to vector<32x64xf32>
    %74 = arith.subf %66, %73 : vector<32x64xf32>
    %75 = arith.mulf %74, %74 : vector<32x64xf32>
    %cst_50 = arith.constant dense<0.000000e+00> : vector<64xf32>
    %76 = vector.multi_reduction <add>, %75, %cst_50 [0] : vector<32x64xf32> to vector<64xf32>
    %77 = vector.shape_cast %76 : vector<64xf32> to vector<1x64xf32>
    %cst_51 = arith.constant 3.200000e+01 : f32
    %78 = vector.broadcast %cst_51 : f32 to vector<1x64xf32>
    %79 = arith.divf %77, %78 : vector<1x64xf32>
    %cst_52 = arith.constant 9.99999974E-6 : f32
    %80 = vector.broadcast %cst_52 : f32 to vector<1x64xf32>
    %81 = arith.addf %79, %80 : vector<1x64xf32>
    %82 = math.rsqrt %81 : vector<1x64xf32>
    %83 = vector.broadcast %82 : vector<1x64xf32> to vector<32x64xf32>
    %84 = arith.mulf %74, %83 : vector<32x64xf32>
    %85 = vector.broadcast %67 : vector<1x64xf32> to vector<32x64xf32>
    %86 = arith.mulf %84, %85 : vector<32x64xf32>
    %87 = vector.broadcast %68 : vector<1x64xf32> to vector<32x64xf32>
    %88 = arith.addf %86, %87 : vector<32x64xf32>
    %cst_53 = arith.constant 0.000000e+00 : f32
    %89 = vector.broadcast %cst_53 : f32 to vector<32x64xf32>
    %90 = arith.maximumf %88, %89 : vector<32x64xf32>
    %91 = vector.shape_cast %90 : vector<32x64xf32> to vector<2x16x64xf32>
    %cst_54 = arith.constant dense<0.000000e+00> : vector<2x64xf32>
    %92 = vector.multi_reduction <add>, %91, %cst_54 [1] : vector<2x16x64xf32> to vector<2x64xf32>
    %cst_55 = arith.constant 1.600000e+01 : f32
    %93 = vector.broadcast %cst_55 : f32 to vector<2x64xf32>
    %94 = arith.divf %92, %93 : vector<2x64xf32>
    %95 = arith.truncf %94 : vector<2x64xf32> to vector<2x64xbf16>
    %c0_56 = arith.constant 0 : index
    %c0_57 = arith.constant 0 : index
    %96 = vector.load %arg8[%c0_56, %c0_57] : memref<64x10xbf16, #tpu.memory_space<vmem>>, vector<64x10xbf16>
    %cst_58 = arith.constant dense<0.000000e+00> : vector<2x10xf32>
    %97 = tpu.matmul %95, %96, %cst_58 {dimension_numbers = #tpu.dot_dimension_numbers<[1], [0], [0], [1], [0, 0, 1, 1], [], []>} : vector<2x64xbf16>, vector<64x10xbf16>, vector<2x10xf32> -> vector<2x10xf32>
    %c0_59 = arith.constant 0 : index
    %c0_60 = arith.constant 0 : index
    %98 = vector.load %arg9[%c0_59, %c0_60] : memref<1x10xf32, #tpu.memory_space<vmem>>, vector<1x10xf32>
    %99 = vector.broadcast %98 : vector<1x10xf32> to vector<2x10xf32>
    %100 = arith.addf %97, %99 : vector<2x10xf32>
    %c0_61 = arith.constant 0 : index
    %c0_62 = arith.constant 0 : index
    %101 = vector.load %arg10[%c0_61, %c0_62] : memref<2x10xf32, #tpu.memory_space<vmem>>, vector<2x10xf32>
    tpu.vector_store %arg10[%c0_61, %c0_62], %100 {strides = array<i32>} : memref<2x10xf32, #tpu.memory_space<vmem>>, vector<2x10xf32>,
    return
  }
}

</mosaic_0001>

<llo_original>
// kernel: aux_classifier_forward.1
$region0: #{aux_classifier_forward.1}
  #allocation0 [shape = 'u32[]', space=smem, size = 0x4, offset = 0x4, fixed_abs, tag = 'smem constant byte address 0x4 - core index']
  #allocation1 [shape = 'u32[144,128]{1,0:T(1,128)}', space=vmem, size = 0x12000, scoped, tag = 'internal scratch']
  %s0 = inlined_call_operand.vmem [shape: bf16[128,144], index: 0, kind: input, shape index: {}]
  %s1 = inlined_call_operand.vmem [shape: bf16[144,32], index: 1, kind: input, shape index: {}]
  %s2 = inlined_call_operand.vmem [shape: f32[1,32], index: 2, kind: input, shape index: {}]
  %s3 = inlined_call_operand.vmem [shape: f32[1,32], index: 3, kind: input, shape index: {}]
  %s4 = inlined_call_operand.vmem [shape: bf16[9,32,128], index: 4, kind: input, shape index: {}]
  %s5 = inlined_call_operand.vmem [shape: bf16[288,64], index: 5, kind: input, shape index: {}]
  %s6 = inlined_call_operand.vmem [shape: f32[1,64], index: 6, kind: input, shape index: {}]
  %s7 = inlined_call_operand.vmem [shape: f32[1,64], index: 7, kind: input, shape index: {}]
  %s8 = inlined_call_operand.vmem [shape: bf16[64,10], index: 8, kind: input, shape index: {}]
  %s9 = inlined_call_operand.vmem [shape: f32[1,10], index: 9, kind: input, shape index: {}]
  %s10 = inlined_call_operand.hbm [shape: f32[2,10], index: 10, kind: output, shape index: {}]
  %s11 = sld [smem:[#allocation0]]
  $region50: #{aux_classifier_forward.1} parent=0
    _
  %s13 = ssub.s32 1, %s11
  %s14 = scalar_select 0, %s13, %s11
  $region1: #{aux_classifier_forward.1} parent=0
    #allocation2 [shape = 'u8[1024]{0}', space=vmem, size = 0x400, scoped, tag = 'output window, operand 0, single buffered']
    #allocation3 [shape = 's32[1]{0}', space=sflag, size = 0x4, scoped, tag = 'scoped memory for aux_classifier_forward.1']
    %15 = vsyncpa [#allocation3], 0
    // Predicated region
    $region2: #{aux_classifier_forward.1} parent=1 // pred_check
      _
    $region3: #{aux_classifier_forward.1} parent=1 // pred_check_branch
      %17 = sbr.rel (0) target = $region5
    $region4: #{aux_classifier_forward.1} parent=1 // pred_region
      _
    $region5: #{aux_classifier_forward.1} parent=1 // pred_fallthru
      _
    // Predicated region
    $region6: #{aux_classifier_forward.1} parent=1 // pred_check
      _
    $region7: #{aux_classifier_forward.1} parent=1 // pred_check_branch
      %19 = sbr.rel (0) target = $region9
    $region8: #{aux_classifier_forward.1} parent=1 // pred_region
      _
    $region9: #{aux_classifier_forward.1} parent=1 // pred_fallthru
      _
    // Predicated region
    $region10: #{aux_classifier_forward.1} parent=1 // pred_check
      _
    $region11: #{aux_classifier_forward.1} parent=1 // pred_check_branch
      %21 = sbr.rel (0) target = $region13
    $region12: #{aux_classifier_forward.1} parent=1 // pred_region
      _
    $region13: #{aux_classifier_forward.1} parent=1 // pred_fallthru
      _
    // Predicated region
    $region14: #{aux_classifier_forward.1} parent=1 // pred_check
      _
    $region15: #{aux_classifier_forward.1} parent=1 // pred_check_branch
      %23 = sbr.rel (0) target = $region17
    $region16: #{aux_classifier_forward.1} parent=1 // pred_region
      _
    $region17: #{aux_classifier_forward.1} parent=1 // pred_fallthru
      _
    // Predicated region
    $region18: #{aux_classifier_forward.1} parent=1 // pred_check
      _
    $region19: #{aux_classifier_forward.1} parent=1 // pred_check_branch
      %25 = sbr.rel (0) target = $region21
    $region20: #{aux_classifier_forward.1} parent=1 // pred_region
      _
    $region21: #{aux_classifier_forward.1} parent=1 // pred_fallthru
      _
    // Predicated region
    $region22: #{aux_classifier_forward.1} parent=1 // pred_check
      _
    $region23: #{aux_classifier_forward.1} parent=1 // pred_check_branch
      %27 = sbr.rel (0) target = $region25
    $region24: #{aux_classifier_forward.1} parent=1 // pred_region
      _
    $region25: #{aux_classifier_forward.1} parent=1 // pred_fallthru
      _
    // Predicated region
    $region26: #{aux_classifier_forward.1} parent=1 // pred_check
      _
    $region27: #{aux_classifier_forward.1} parent=1 // pred_check_branch
      %29 = sbr.rel (0) target = $region29
    $region28: #{aux_classifier_forward.1} parent=1 // pred_region
      _
    $region29: #{aux_classifier_forward.1} parent=1 // pred_fallthru
      _
    // Predicated region
    $region30: #{aux_classifier_forward.1} parent=1 // pred_check
      _
    $region31: #{aux_classifier_forward.1} parent=1 // pred_check_branch
      %31 = sbr.rel (0) target = $region33
    $region32: #{aux_classifier_forward.1} parent=1 // pred_region
      _
    $region33: #{aux_classifier_forward.1} parent=1 // pred_fallthru
      _
    // Predicated region
    $region34: #{aux_classifier_forward.1} parent=1 // pred_check
      _
    $region35: #{aux_classifier_forward.1} parent=1 // pred_check_branch
      %33 = sbr.rel (0) target = $region37
    $region36: #{aux_classifier_forward.1} parent=1 // pred_region
      _
    $region37: #{aux_classifier_forward.1} parent=1 // pred_fallthru
      _
    // Predicated region
    $region38: #{aux_classifier_forward.1} parent=1 // pred_check
      _
    $region39: #{aux_classifier_forward.1} parent=1 // pred_check_branch
      %35 = sbr.rel (0) target = $region41
    $region40: #{aux_classifier_forward.1} parent=1 // pred_region
      _
    $region41: #{aux_classifier_forward.1} parent=1 // pred_fallthru
      _
    %v37 = vld [vmem:[%s0] sm:$0xff]
    %v38 = vld [vmem:[%s0 + $0x8] sm:$0xff]
    %v39 = vld [vmem:[%s0 + $0x10] sm:$0xff]
    %v40 = vld [vmem:[%s0 + $0x18] sm:$0xff]
    %v41 = vld [vmem:[%s0 + $0x20] sm:$0xff]
    %v42 = vld [vmem:[%s0 + $0x28] sm:$0xff]
    %v43 = vld [vmem:[%s0 + $0x30] sm:$0xff]
    %v44 = vld [vmem:[%s0 + $0x38] sm:$0xff]
    %v45 = vld [vmem:[%s0 + $0x40] sm:$0xff]
    %v46 = vld [vmem:[%s0 + $0x48] sm:$0xff]
    %v47 = vld [vmem:[%s0 + $0x50] sm:$0xff]
    %v48 = vld [vmem:[%s0 + $0x58] sm:$0xff]
    %v49 = vld [vmem:[%s0 + $0x60] sm:$0xff]
    %v50 = vld [vmem:[%s0 + $0x68] sm:$0xff]
    %v51 = vld [vmem:[%s0 + $0x70] sm:$0xff]
    %v52 = vld [vmem:[%s0 + $0x78] sm:$0xff]
    %v53 = vld [vmem:[%s1] sm:$0xf]
    %v54 = vld [vmem:[%s1 + $0x4] sm:$0xf]
    %v55 = vld [vmem:[%s1 + $0x8] sm:$0xf]
    %v56 = vld [vmem:[%s1 + $0xc] sm:$0xf]
    %v57 = vld [vmem:[%s1 + $0x10] sm:$0xf]
    %v58 = vld [vmem:[%s1 + $0x14] sm:$0xf]
    %v59 = vld [vmem:[%s1 + $0x18] sm:$0xf]
    %v60 = vld [vmem:[%s1 + $0x1c] sm:$0xf]
    %v61 = vld [vmem:[%s1 + $0x20] sm:$0xf]
    %v62 = vld [vmem:[%s1 + $0x24] sm:$0xf]
    %v63 = vld [vmem:[%s1 + $0x28] sm:$0xf]
    %v64 = vld [vmem:[%s1 + $0x2c] sm:$0xf]
    %v65 = vld [vmem:[%s1 + $0x30] sm:$0xf]
    %v66 = vld [vmem:[%s1 + $0x34] sm:$0xf]
    %v67 = vld [vmem:[%s1 + $0x38] sm:$0xf]
    %v68 = vld [vmem:[%s1 + $0x3c] sm:$0xf]
    %v69 = vld [vmem:[%s1 + $0x40] sm:$0xf]
    %v70 = vld [vmem:[%s1 + $0x44] sm:$0xf]
    %v87 = vunpack.c.l.b16 %v37
    %v88 = vunpack.c.h.b16 %v37
    %v89 = vunpack.c.l.b16 %v38
    %v90 = vunpack.c.h.b16 %v38
    %v91 = vunpack.c.l.b16 %v39
    %v92 = vunpack.c.h.b16 %v39
    %v93 = vunpack.c.l.b16 %v40
    %v94 = vunpack.c.h.b16 %v40
    %v95 = vunpack.c.l.b16 %v41
    %v96 = vunpack.c.h.b16 %v41
    %v97 = vunpack.c.l.b16 %v42
    %v98 = vunpack.c.h.b16 %v42
    %v99 = vunpack.c.l.b16 %v43
    %v100 = vunpack.c.h.b16 %v43
    %v101 = vunpack.c.l.b16 %v44
    %v102 = vunpack.c.h.b16 %v44
    %v103 = vunpack.c.l.b16 %v45
    %v104 = vunpack.c.h.b16 %v45
    %v105 = vunpack.c.l.b16 %v46
    %v106 = vunpack.c.h.b16 %v46
    %v107 = vunpack.c.l.b16 %v47
    %v108 = vunpack.c.h.b16 %v47
    %v109 = vunpack.c.l.b16 %v48
    %v110 = vunpack.c.h.b16 %v48
    %v111 = vunpack.c.l.b16 %v49
    %v112 = vunpack.c.h.b16 %v49
    %v113 = vunpack.c.l.b16 %v50
    %v114 = vunpack.c.h.b16 %v50
    %v115 = vunpack.c.l.b16 %v51
    %v116 = vunpack.c.h.b16 %v51
    %v117 = vunpack.c.l.b16 %v52
    %v118 = vunpack.c.h.b16 %v52
    %v119 = vpack.c.b16 %v89, %v87
    %v120 = vpack.c.b16 %v90, %v88
    %v121 = vpack.c.b16 %v93, %v91
    %v122 = vpack.c.b16 %v94, %v92
    %v123 = vpack.c.b16 %v97, %v95
    %v124 = vpack.c.b16 %v98, %v96
    %v125 = vpack.c.b16 %v101, %v99
    %v126 = vpack.c.b16 %v102, %v100
    %v127 = vpack.c.b16 %v105, %v103
    %v128 = vpack.c.b16 %v106, %v104
    %v129 = vpack.c.b16 %v109, %v107
    %v130 = vpack.c.b16 %v110, %v108
    %v131 = vpack.c.b16 %v113, %v111
    %v132 = vpack.c.b16 %v114, %v112
    %v133 = vpack.c.b16 %v117, %v115
    %v134 = vpack.c.b16 %v118, %v116
    %v161 = vunpack.c.l.b16 %v53
    %v162 = vunpack.c.l.b16 %v54
    %v163 = vunpack.c.l.b16 %v55
    %v164 = vunpack.c.l.b16 %v56
    %v165 = vunpack.c.l.b16 %v57
    %v166 = vunpack.c.l.b16 %v58
    %v167 = vunpack.c.l.b16 %v59
    %v168 = vunpack.c.l.b16 %v60
    %v169 = vunpack.c.l.b16 %v61
    %v170 = vunpack.c.l.b16 %v62
    %v171 = vunpack.c.l.b16 %v63
    %v172 = vunpack.c.l.b16 %v64
    %v173 = vunpack.c.l.b16 %v65
    %v174 = vunpack.c.l.b16 %v66
    %v175 = vunpack.c.l.b16 %v67
    %v176 = vunpack.c.l.b16 %v68
    %v177 = vunpack.c.l.b16 %v69
    %v178 = vunpack.c.l.b16 %v70
    %v179 = vpack.c.b16 %v162, %v161
    %v180 = vpack.c.b16 %v164, %v163
    %v181 = vpack.c.b16 %v166, %v165
    %v182 = vpack.c.b16 %v168, %v167
    %v183 = vpack.c.b16 %v170, %v169
    %v184 = vpack.c.b16 %v172, %v171
    %v185 = vpack.c.b16 %v174, %v173
    %v186 = vpack.c.b16 %v176, %v175
    %v187 = vpack.c.b16 %v178, %v177
    %vm197 = vcmask 130048
    %v199 = vsel %vm197, %v120, 0
    %v202 = vsel %vm197, %v122, 0
    %v205 = vsel %vm197, %v124, 0
    %v208 = vsel %vm197, %v126, 0
    %v211 = vsel %vm197, %v128, 0
    %v214 = vsel %vm197, %v130, 0
    %v217 = vsel %vm197, %v132, 0
    %v220 = vsel %vm197, %v134, 0
    %222 = vmatprep.subr.bf16.mxu0 0
    %223 = vmatpush1.bf16.msra.mxu0 %v179
    %224 = vmatprep.subr.bf16.mxu0 0
    %225 = vmatpush1.bf16.msra.mxu0 %v180
    %226 = vmatprep.subr.bf16.mxu0 0
    %227 = vmatpush1.bf16.msra.mxu0 %v181
    %228 = vmatprep.subr.bf16.mxu0 0
    %229 = vmatpush1.bf16.msra.mxu0 %v182
    %230 = vmatprep.subr.bf16.mxu0 0
    %231 = vmatpush1.bf16.msra.mxu0 %v183
    %232 = vmatprep.subr.bf16.mxu0 0
    %233 = vmatpush1.bf16.msra.mxu0 %v184
    %234 = vmatprep.subr.bf16.mxu0 0
    %235 = vmatpush1.bf16.msra.mxu0 %v185
    %236 = vmatprep.subr.bf16.mxu0 0
    %237 = vmatpush1.bf16.msra.mxu0 %v186
    %238 = vmatprep.subr.bf16.mxu0 0
    %239 = vmatpush1.bf16.msra.mxu0 %v187
    %240 = vmatprep.subr.bf16.mxu0 0
    %241 = vmatpush1.bf16.msra.mxu0 0
    %242 = vmatprep.subr.bf16.mxu0 0
    %243 = vmatpush1.bf16.msra.mxu0 0
    %244 = vmatprep.subr.bf16.mxu0 0
    %245 = vmatpush1.bf16.msra.mxu0 0
    %246 = vmatprep.subr.bf16.mxu0 0
    %247 = vmatpush1.bf16.msra.mxu0 0
    %248 = vmatprep.subr.bf16.mxu0 0
    %249 = vmatpush1.bf16.msra.mxu0 0
    %250 = vmatprep.subr.bf16.mxu0 0
    %251 = vmatpush1.bf16.msra.mxu0 0
    %252 = vmatprep.subr.bf16.mxu0 0
    %253 = vmatpush1.bf16.msra.mxu0 0
    %254 = vmatprep.mubr.bf16.mxu0 %v199
    %255 = vmatmul.mubr.bf16.gmra.mrb[0].mxu0 %v119
    %v256 = vpop.f32.mrb[0].mxu0
    %v257 = vadd.f32 0.0, %v256
    %v258 = vpop.f32.mrb[0].mxu0
    %v259 = vpop.f32.mrb[0].mxu0
    %v260 = vadd.f32 0.0, %v259
    %v261 = vpop.f32.mrb[0].mxu0
    %262 = vmatprep.mubr.bf16.mxu0 %v202
    %263 = vmatmul.mubr.bf16.gmra.mrb[0].mxu0 %v121
    %v264 = vpop.f32.mrb[0].mxu0
    %v265 = vadd.f32 0.0, %v264
    %v266 = vpop.f32.mrb[0].mxu0
    %v267 = vpop.f32.mrb[0].mxu0
    %v268 = vadd.f32 0.0, %v267
    %v269 = vpop.f32.mrb[0].mxu0
    %270 = vmatprep.mubr.bf16.mxu0 %v205
    %271 = vmatmul.mubr.bf16.gmra.mrb[0].mxu0 %v123
    %v272 = vpop.f32.mrb[0].mxu0
    %v273 = vadd.f32 0.0, %v272
    %v274 = vpop.f32.mrb[0].mxu0
    %v275 = vpop.f32.mrb[0].mxu0
    %v276 = vadd.f32 0.0, %v275
    %v277 = vpop.f32.mrb[0].mxu0
    %278 = vmatprep.mubr.bf16.mxu0 %v208
    %279 = vmatmul.mubr.bf16.gmra.mrb[0].mxu0 %v125
    %v280 = vpop.f32.mrb[0].mxu0
    %v281 = vadd.f32 0.0, %v280
    %v282 = vpop.f32.mrb[0].mxu0
    %v283 = vpop.f32.mrb[0].mxu0
    %v284 = vadd.f32 0.0, %v283
    %v285 = vpop.f32.mrb[0].mxu0
    %286 = vmatprep.mubr.bf16.mxu0 %v211
    %287 = vmatmul.mubr.bf16.gmra.mrb[0].mxu0 %v127
    %v288 = vpop.f32.mrb[0].mxu0
    %v289 = vadd.f32 0.0, %v288
    %v290 = vpop.f32.mrb[0].mxu0
    %v291 = vpop.f32.mrb[0].mxu0
    %v292 = vadd.f32 0.0, %v291
    %v293 = vpop.f32.mrb[0].mxu0
    %294 = vmatprep.mubr.bf16.mxu0 %v214
    %295 = vmatmul.mubr.bf16.gmra.mrb[0].mxu0 %v129
    %v296 = vpop.f32.mrb[0].mxu0
    %v297 = vadd.f32 0.0, %v296
    %v298 = vpop.f32.mrb[0].mxu0
    %v299 = vpop.f32.mrb[0].mxu0
    %v300 = vadd.f32 0.0, %v299
    %v301 = vpop.f32.mrb[0].mxu0
    %302 = vmatprep.mubr.bf16.mxu0 %v217
    %303 = vmatmul.mubr.bf16.gmra.mrb[0].mxu0 %v131
    %v304 = vpop.f32.mrb[0].mxu0
    %v305 = vadd.f32 0.0, %v304
    %v306 = vpop.f32.mrb[0].mxu0
    %v307 = vpop.f32.mrb[0].mxu0
    %v308 = vadd.f32 0.0, %v307
    %v309 = vpop.f32.mrb[0].mxu0
    %310 = vmatprep.mubr.bf16.mxu0 %v220
    %311 = vmatmul.mubr.bf16.gmra.mrb[0].mxu0 %v133
    %v312 = vpop.f32.mrb[0].mxu0
    %v313 = vadd.f32 0.0, %v312
    %v314 = vpop.f32.mrb[0].mxu0
    %v315 = vpop.f32.mrb[0].mxu0
    %v316 = vadd.f32 0.0, %v315
    %v317 = vpop.f32.mrb[0].mxu0
    %318 = vdwg.mxu0
    %v319 = vld [vmem:[%s2] sm:$0x1]
    %v320 = vld [vmem:[%s3] sm:$0x1]
    %vm321 = vcmask 261120
    %v322 = vsel %vm321, %v257, 0.0
    %v323 = vsel %vm321, %v260, 0.0
    %v324 = vadd.f32 %v322, %v323
    %v325 = vsel %vm321, %v265, 0.0
    %v326 = vadd.f32 %v324, %v325
    %v327 = vsel %vm321, %v268, 0.0
    %v328 = vadd.f32 %v326, %v327
    %v329 = vsel %vm321, %v273, 0.0
    %v330 = vadd.f32 %v328, %v329
    %v331 = vsel %vm321, %v276, 0.0
    %v332 = vadd.f32 %v330, %v331
    %v333 = vsel %vm321, %v281, 0.0
    %v334 = vadd.f32 %v332, %v333
    %v335 = vsel %vm321, %v284, 0.0
    %v336 = vadd.f32 %v334, %v335
    %v337 = vsel %vm321, %v289, 0.0
    %v338 = vadd.f32 %v336, %v337
    %v339 = vsel %vm321, %v292, 0.0
    %v340 = vadd.f32 %v338, %v339
    %v341 = vsel %vm321, %v297, 0.0
    %v342 = vadd.f32 %v340, %v341
    %v343 = vsel %vm321, %v300, 0.0
    %v344 = vadd.f32 %v342, %v343
    %v345 = vsel %vm321, %v305, 0.0
    %v346 = vadd.f32 %v344, %v345
    %v347 = vsel %vm321, %v308, 0.0
    %v348 = vadd.f32 %v346, %v347
    %v349 = vsel %vm321, %v313, 0.0
    %v350 = vadd.f32 %v348, %v349
    %v351 = vsel %vm321, %v316, 0.0
    %v352 = vadd.f32 %v350, %v351
    %v353 = vrot.slane %v352, 4
    %v354 = vadd.f32 %v352, %v353
    %v355 = vrot.slane %v354, 2
    %v356 = vadd.f32 %v354, %v355
    %v357 = vrot.slane %v356, 1
    %v358 = vadd.f32 %v356, %v357
    %v359 = vrcp.pop 128.0
    %v360 = vmul.f32 %v358, %v359
    %v361 = vsub.f32 %v257, %v360
    %v362 = vsub.f32 %v260, %v360
    %v363 = vsub.f32 %v265, %v360
    %v364 = vsub.f32 %v268, %v360
    %v365 = vsub.f32 %v273, %v360
    %v366 = vsub.f32 %v276, %v360
    %v367 = vsub.f32 %v281, %v360
    %v368 = vsub.f32 %v284, %v360
    %v369 = vsub.f32 %v289, %v360
    %v370 = vsub.f32 %v292, %v360
    %v371 = vsub.f32 %v297, %v360
    %v372 = vsub.f32 %v300, %v360
    %v373 = vsub.f32 %v305, %v360
    %v374 = vsub.f32 %v308, %v360
    %v375 = vsub.f32 %v313, %v360
    %v376 = vsub.f32 %v316, %v360
    %v377 = vmul.f32 %v361, %v361
    %v378 = vmul.f32 %v362, %v362
    %v379 = vmul.f32 %v363, %v363
    %v380 = vmul.f32 %v364, %v364
    %v381 = vmul.f32 %v365, %v365
    %v382 = vmul.f32 %v366, %v366
    %v383 = vmul.f32 %v367, %v367
    %v384 = vmul.f32 %v368, %v368
    %v385 = vmul.f32 %v369, %v369
    %v386 = vmul.f32 %v370, %v370
    %v387 = vmul.f32 %v371, %v371
    %v388 = vmul.f32 %v372, %v372
    %v389 = vmul.f32 %v373, %v373
    %v390 = vmul.f32 %v374, %v374
    %v391 = vmul.f32 %v375, %v375
    %v392 = vmul.f32 %v376, %v376
    %v393 = vsel %vm321, %v377, 0.0
    %v394 = vsel %vm321, %v378, 0.0
    %v395 = vadd.f32 %v393, %v394
    %v396 = vsel %vm321, %v379, 0.0
    %v397 = vadd.f32 %v395, %v396
    %v398 = vsel %vm321, %v380, 0.0
    %v399 = vadd.f32 %v397, %v398
    %v400 = vsel %vm321, %v381, 0.0
    %v401 = vadd.f32 %v399, %v400
    %v402 = vsel %vm321, %v382, 0.0
    %v403 = vadd.f32 %v401, %v402
    %v404 = vsel %vm321, %v383, 0.0
    %v405 = vadd.f32 %v403, %v404
    %v406 = vsel %vm321, %v384, 0.0
    %v407 = vadd.f32 %v405, %v406
    %v408 = vsel %vm321, %v385, 0.0
    %v409 = vadd.f32 %v407, %v408
    %v410 = vsel %vm321, %v386, 0.0
    %v411 = vadd.f32 %v409, %v410
    %v412 = vsel %vm321, %v387, 0.0
    %v413 = vadd.f32 %v411, %v412
    %v414 = vsel %vm321, %v388, 0.0
    %v415 = vadd.f32 %v413, %v414
    %v416 = vsel %vm321, %v389, 0.0
    %v417 = vadd.f32 %v415, %v416
    %v418 = vsel %vm321, %v390, 0.0
    %v419 = vadd.f32 %v417, %v418
    %v420 = vsel %vm321, %v391, 0.0
    %v421 = vadd.f32 %v419, %v420
    %v422 = vsel %vm321, %v392, 0.0
    %v423 = vadd.f32 %v421, %v422
    %v424 = vrot.slane %v423, 4
    %v425 = vadd.f32 %v423, %v424
    %v426 = vrot.slane %v425, 2
    %v427 = vadd.f32 %v425, %v426
    %v428 = vrot.slane %v427, 1
    %v429 = vadd.f32 %v427, %v428
    %v430 = vmul.f32 %v429, %v359
    %v431 = vadd.f32 %v430, 1e-05
    %v432 = vrsqrt.pop %v431
    %v433 = vmul.f32 %v361, %v432
    %v434 = vmul.f32 %v362, %v432
    %v435 = vmul.f32 %v363, %v432
    %v436 = vmul.f32 %v364, %v432
    %v437 = vmul.f32 %v365, %v432
    %v438 = vmul.f32 %v366, %v432
    %v439 = vmul.f32 %v367, %v432
    %v440 = vmul.f32 %v368, %v432
    %v441 = vmul.f32 %v369, %v432
    %v442 = vmul.f32 %v370, %v432
    %v443 = vmul.f32 %v371, %v432
    %v444 = vmul.f32 %v372, %v432
    %v445 = vmul.f32 %v373, %v432
    %v446 = vmul.f32 %v374, %v432
    %v447 = vmul.f32 %v375, %v432
    %v448 = vmul.f32 %v376, %v432
    %v450 = vlaneseq
    %v451 = vshrl.u32 %v450, 7
    %v452 = vsub.s32 0, %v451
    %v453 = vrot.slane %v319, %v452
    %v455 = vmul.f32 %v433, %v453
    %v456 = vmul.f32 %v434, %v453
    %v457 = vmul.f32 %v435, %v453
    %v458 = vmul.f32 %v436, %v453
    %v459 = vmul.f32 %v437, %v453
    %v460 = vmul.f32 %v438, %v453
    %v461 = vmul.f32 %v439, %v453
    %v462 = vmul.f32 %v440, %v453
    %v463 = vmul.f32 %v441, %v453
    %v464 = vmul.f32 %v442, %v453
    %v465 = vmul.f32 %v443, %v453
    %v466 = vmul.f32 %v444, %v453
    %v467 = vmul.f32 %v445, %v453
    %v468 = vmul.f32 %v446, %v453
    %v469 = vmul.f32 %v447, %v453
    %v470 = vmul.f32 %v448, %v453
    %v472 = vlaneseq
    %v473 = vshrl.u32 %v472, 7
    %v474 = vsub.s32 0, %v473
    %v475 = vrot.slane %v320, %v474
    %v477 = vadd.f32 %v455, %v475
    %v478 = vadd.f32 %v456, %v475
    %v479 = vadd.f32 %v457, %v475
    %v480 = vadd.f32 %v458, %v475
    %v481 = vadd.f32 %v459, %v475
    %v482 = vadd.f32 %v460, %v475
    %v483 = vadd.f32 %v461, %v475
    %v484 = vadd.f32 %v462, %v475
    %v485 = vadd.f32 %v463, %v475
    %v486 = vadd.f32 %v464, %v475
    %v487 = vadd.f32 %v465, %v475
    %v488 = vadd.f32 %v466, %v475
    %v489 = vadd.f32 %v467, %v475
    %v490 = vadd.f32 %v468, %v475
    %v491 = vadd.f32 %v469, %v475
    %v492 = vadd.f32 %v470, %v475
    %v493 = vmax.f32 %v477, 0.0
    %v494 = vmax.f32 %v478, 0.0
    %v495 = vmax.f32 %v479, 0.0
    %v496 = vmax.f32 %v480, 0.0
    %v497 = vmax.f32 %v481, 0.0
    %v498 = vmax.f32 %v482, 0.0
    %v499 = vmax.f32 %v483, 0.0
    %v500 = vmax.f32 %v484, 0.0
    %v501 = vmax.f32 %v485, 0.0
    %v502 = vmax.f32 %v486, 0.0
    %v503 = vmax.f32 %v487, 0.0
    %v504 = vmax.f32 %v488, 0.0
    %v505 = vmax.f32 %v489, 0.0
    %v506 = vmax.f32 %v490, 0.0
    %v507 = vmax.f32 %v491, 0.0
    %v508 = vmax.f32 %v492, 0.0
    %v509 = vpack.c.bf16 %v494, %v493
    %v510 = vpack.c.bf16 %v496, %v495
    %v511 = vpack.c.bf16 %v498, %v497
    %v512 = vpack.c.bf16 %v500, %v499
    %v513 = vpack.c.bf16 %v502, %v501
    %v514 = vpack.c.bf16 %v504, %v503
    %v515 = vpack.c.bf16 %v506, %v505
    %v516 = vpack.c.bf16 %v508, %v507
    %v517 = vld [vmem:[%s4] sm:$0xf]
    %v518 = vld [vmem:[%s4 + $0x4] sm:$0xf]
    %v519 = vld [vmem:[%s4 + $0x8] sm:$0xf]
    %v520 = vld [vmem:[%s4 + $0xc] sm:$0xf]
    %v525 = vunpack.c.l.b16 %v517
    %v526 = vunpack.c.l.b16 %v518
    %v527 = vunpack.c.l.b16 %v519
    %v528 = vunpack.c.l.b16 %v520
    %v529 = vpack.c.b16 %v526, %v525
    %v530 = vpack.c.b16 %v528, %v527
    %533 = vmatprep.subr.bf16.mxu0 0
    %534 = vmatpush1.bf16.msra.mxu0 %v509
    %535 = vmatprep.subr.bf16.mxu0 0
    %536 = vmatpush1.bf16.msra.mxu0 %v510
    %537 = vmatprep.subr.bf16.mxu0 0
    %538 = vmatpush1.bf16.msra.mxu0 %v511
    %539 = vmatprep.subr.bf16.mxu0 0
    %540 = vmatpush1.bf16.msra.mxu0 %v512
    %541 = vmatprep.subr.bf16.mxu0 0
    %542 = vmatpush1.bf16.msra.mxu0 %v513
    %543 = vmatprep.subr.bf16.mxu0 0
    %544 = vmatpush1.bf16.msra.mxu0 %v514
    %545 = vmatprep.subr.bf16.mxu0 0
    %546 = vmatpush1.bf16.msra.mxu0 %v515
    %547 = vmatprep.subr.bf16.mxu0 0
    %548 = vmatpush1.bf16.msra.mxu0 %v516
    %549 = vmatprep.subr.bf16.mxu0 0
    %550 = vmatpush1.bf16.msra.mxu0 0
    %551 = vmatprep.subr.bf16.mxu0 0
    %552 = vmatpush1.bf16.msra.mxu0 0
    %553 = vmatprep.subr.bf16.mxu0 0
    %554 = vmatpush1.bf16.msra.mxu0 0
    %555 = vmatprep.subr.bf16.mxu0 0
    %556 = vmatpush1.bf16.msra.mxu0 0
    %557 = vmatprep.subr.bf16.mxu0 0
    %558 = vmatpush1.bf16.msra.mxu0 0
    %559 = vmatprep.subr.bf16.mxu0 0
    %560 = vmatpush1.bf16.msra.mxu0 0
    %561 = vmatprep.subr.bf16.mxu0 0
    %562 = vmatpush1.bf16.msra.mxu0 0
    %563 = vmatprep.subr.bf16.mxu0 0
    %564 = vmatpush1.bf16.msra.mxu0 0
    %565 = vmatprep.mubr.bf16.mxu0 0
    %566 = vmatmul.mubr.bf16.gmra.mrb[0].mxu0 %v529
    %v567 = vpop.f32.mrb[0].mxu0
    %v568 = vadd.f32 0.0, %v567
    %v569 = vpop.f32.mrb[0].mxu0
    %v570 = vpop.f32.mrb[0].mxu0
    %v571 = vadd.f32 0.0, %v570
    %v572 = vpop.f32.mrb[0].mxu0
    %573 = vmatprep.mubr.bf16.mxu0 0
    %574 = vmatmul.mubr.bf16.gmra.mrb[0].mxu0 %v530
    %v575 = vpop.f32.mrb[0].mxu0
    %v576 = vadd.f32 0.0, %v575
    %v577 = vpop.f32.mrb[0].mxu0
    %v578 = vpop.f32.mrb[0].mxu0
    %v579 = vadd.f32 0.0, %v578
    %v580 = vpop.f32.mrb[0].mxu0
    %581 = vdwg.mxu0
    %v582 = vpack.c.bf16 %v571, %v568
    %v583 = vpack.c.bf16 %v579, %v576
    %s584 = scalar_lea.vmem %s4, 16
    %v585 = vld [vmem:[%s584] sm:$0xf]
    %v586 = vld [vmem:[%s584 + $0x4] sm:$0xf]
    %v587 = vld [vmem:[%s584 + $0x8] sm:$0xf]
    %v588 = vld [vmem:[%s584 + $0xc] sm:$0xf]
    %v593 = vunpack.c.l.b16 %v585
    %v594 = vunpack.c.l.b16 %v586
    %v595 = vunpack.c.l.b16 %v587
    %v596 = vunpack.c.l.b16 %v588
    %v597 = vpack.c.b16 %v594, %v593
    %v598 = vpack.c.b16 %v596, %v595
    %601 = vmatprep.subr.bf16.mxu0 0
    %602 = vmatpush1.bf16.msra.mxu0 %v509
    %603 = vmatprep.subr.bf16.mxu0 0
    %604 = vmatpush1.bf16.msra.mxu0 %v510
    %605 = vmatprep.subr.bf16.mxu0 0
    %606 = vmatpush1.bf16.msra.mxu0 %v511
    %607 = vmatprep.subr.bf16.mxu0 0
    %608 = vmatpush1.bf16.msra.mxu0 %v512
    %609 = vmatprep.subr.bf16.mxu0 0
    %610 = vmatpush1.bf16.msra.mxu0 %v513
    %611 = vmatprep.subr.bf16.mxu0 0
    %612 = vmatpush1.bf16.msra.mxu0 %v514
    %613 = vmatprep.subr.bf16.mxu0 0
    %614 = vmatpush1.bf16.msra.mxu0 %v515
    %615 = vmatprep.subr.bf16.mxu0 0
    %616 = vmatpush1.bf16.msra.mxu0 %v516
    %617 = vmatprep.subr.bf16.mxu0 0
    %618 = vmatpush1.bf16.msra.mxu0 0
    %619 = vmatprep.subr.bf16.mxu0 0
    %620 = vmatpush1.bf16.msra.mxu0 0
    %621 = vmatprep.subr.bf16.mxu0 0
    %622 = vmatpush1.bf16.msra.mxu0 0
    %623 = vmatprep.subr.bf16.mxu0 0
    %624 = vmatpush1.bf16.msra.mxu0 0
    %625 = vmatprep.subr.bf16.mxu0 0
    %626 = vmatpush1.bf16.msra.mxu0 0
    %627 = vmatprep.subr.bf16.mxu0 0
    %628 = vmatpush1.bf16.msra.mxu0 0
    %629 = vmatprep.subr.bf16.mxu0 0
    %630 = vmatpush1.bf16.msra.mxu0 0
    %631 = vmatprep.subr.bf16.mxu0 0
    %632 = vmatpush1.bf16.msra.mxu0 0
    %633 = vmatprep.mubr.bf16.mxu0 0
    %634 = vmatmul.mubr.bf16.gmra.mrb[0].mxu0 %v597
    %v635 = vpop.f32.mrb[0].mxu0
    %v636 = vadd.f32 0.0, %v635
    %v637 = vpop.f32.mrb[0].mxu0
    %v638 = vpop.f32.mrb[0].mxu0
    %v639 = vadd.f32 0.0, %v638
    %v640 = vpop.f32.mrb[0].mxu0
    %641 = vmatprep.mubr.bf16.mxu0 0
    %642 = vmatmul.mubr.bf16.gmra.mrb[0].mxu0 %v598
    %v643 = vpop.f32.mrb[0].mxu0
    %v644 = vadd.f32 0.0, %v643
    %v645 = vpop.f32.mrb[0].mxu0
    %v646 = vpop.f32.mrb[0].mxu0
    %v647 = vadd.f32 0.0, %v646
    %v648 = vpop.f32.mrb[0].mxu0
    %649 = vdwg.mxu0
    %v650 = vpack.c.bf16 %v639, %v636
    %v651 = vpack.c.bf16 %v647, %v644
    %s652 = scalar_lea.vmem %s4, 32
    %v653 = vld [vmem:[%s652] sm:$0xf]
    %v654 = vld [vmem:[%s652 + $0x4] sm:$0xf]
    %v655 = vld [vmem:[%s652 + $0x8] sm:$0xf]
    %v656 = vld [vmem:[%s652 + $0xc] sm:$0xf]
    %v661 = vunpack.c.l.b16 %v653
    %v662 = vunpack.c.l.b16 %v654
    %v663 = vunpack.c.l.b16 %v655
    %v664 = vunpack.c.l.b16 %v656
    %v665 = vpack.c.b16 %v662, %v661
    %v666 = vpack.c.b16 %v664, %v663
    %669 = vmatprep.subr.bf16.mxu0 0
    %670 = vmatpush1.bf16.msra.mxu0 %v509
    %671 = vmatprep.subr.bf16.mxu0 0
    %672 = vmatpush1.bf16.msra.mxu0 %v510
    %673 = vmatprep.subr.bf16.mxu0 0
    %674 = vmatpush1.bf16.msra.mxu0 %v511
    %675 = vmatprep.subr.bf16.mxu0 0
    %676 = vmatpush1.bf16.msra.mxu0 %v512
    %677 = vmatprep.subr.bf16.mxu0 0
    %678 = vmatpush1.bf16.msra.mxu0 %v513
    %679 = vmatprep.subr.bf16.mxu0 0
    %680 = vmatpush1.bf16.msra.mxu0 %v514
    %681 = vmatprep.subr.bf16.mxu0 0
    %682 = vmatpush1.bf16.msra.mxu0 %v515
    %683 = vmatprep.subr.bf16.mxu0 0
    %684 = vmatpush1.bf16.msra.mxu0 %v516
    %685 = vmatprep.subr.bf16.mxu0 0
    %686 = vmatpush1.bf16.msra.mxu0 0
    %687 = vmatprep.subr.bf16.mxu0 0
    %688 = vmatpush1.bf16.msra.mxu0 0
    %689 = vmatprep.subr.bf16.mxu0 0
    %690 = vmatpush1.bf16.msra.mxu0 0
    %691 = vmatprep.subr.bf16.mxu0 0
    %692 = vmatpush1.bf16.msra.mxu0 0
    %693 = vmatprep.subr.bf16.mxu0 0
    %694 = vmatpush1.bf16.msra.mxu0 0
    %695 = vmatprep.subr.bf16.mxu0 0
    %696 = vmatpush1.bf16.msra.mxu0 0
    %697 = vmatprep.subr.bf16.mxu0 0
    %698 = vmatpush1.bf16.msra.mxu0 0
    %699 = vmatprep.subr.bf16.mxu0 0
    %700 = vmatpush1.bf16.msra.mxu0 0
    %701 = vmatprep.mubr.bf16.mxu0 0
    %702 = vmatmul.mubr.bf16.gmra.mrb[0].mxu0 %v665
    %v703 = vpop.f32.mrb[0].mxu0
    %v704 = vadd.f32 0.0, %v703
    %v705 = vpop.f32.mrb[0].mxu0
    %v706 = vpop.f32.mrb[0].mxu0
    %v707 = vadd.f32 0.0, %v706
    %v708 = vpop.f32.mrb[0].mxu0
    %709 = vmatprep.mubr.bf16.mxu0 0
    %710 = vmatmul.mubr.bf16.gmra.mrb[0].mxu0 %v666
    %v711 = vpop.f32.mrb[0].mxu0
    %v712 = vadd.f32 0.0, %v711
    %v713 = vpop.f32.mrb[0].mxu0
    %v714 = vpop.f32.mrb[0].mxu0
    %v715 = vadd.f32 0.0, %v714
    %v716 = vpop.f32.mrb[0].mxu0
    %717 = vdwg.mxu0
    %v718 = vpack.c.bf16 %v707, %v704
    %v719 = vpack.c.bf16 %v715, %v712
    %s720 = scalar_lea.vmem %s4, 48
    %v721 = vld [vmem:[%s720] sm:$0xf]
    %v722 = vld [vmem:[%s720 + $0x4] sm:$0xf]
    %v723 = vld [vmem:[%s720 + $0x8] sm:$0xf]
    %v724 = vld [vmem:[%s720 + $0xc] sm:$0xf]
    %v729 = vunpack.c.l.b16 %v721
    %v730 = vunpack.c.l.b16 %v722
    %v731 = vunpack.c.l.b16 %v723
    %v732 = vunpack.c.l.b16 %v724
    %v733 = vpack.c.b16 %v730, %v729
    %v734 = vpack.c.b16 %v732, %v731
    %737 = vmatprep.subr.bf16.mxu0 0
    %738 = vmatpush1.bf16.msra.mxu0 %v509
    %739 = vmatprep.subr.bf16.mxu0 0
    %740 = vmatpush1.bf16.msra.mxu0 %v510
    %741 = vmatprep.subr.bf16.mxu0 0
    %742 = vmatpush1.bf16.msra.mxu0 %v511
    %743 = vmatprep.subr.bf16.mxu0 0
    %744 = vmatpush1.bf16.msra.mxu0 %v512
    %745 = vmatprep.subr.bf16.mxu0 0
    %746 = vmatpush1.bf16.msra.mxu0 %v513
    %747 = vmatprep.subr.bf16.mxu0 0
    %748 = vmatpush1.bf16.msra.mxu0 %v514
    %749 = vmatprep.subr.bf16.mxu0 0
    %750 = vmatpush1.bf16.msra.mxu0 %v515
    %751 = vmatprep.subr.bf16.mxu0 0
    %752 = vmatpush1.bf16.msra.mxu0 %v516
    %753 = vmatprep.subr.bf16.mxu0 0
    %754 = vmatpush1.bf16.msra.mxu0 0
    %755 = vmatprep.subr.bf16.mxu0 0
    %756 = vmatpush1.bf16.msra.mxu0 0
    %757 = vmatprep.subr.bf16.mxu0 0
    %758 = vmatpush1.bf16.msra.mxu0 0
    %759 = vmatprep.subr.bf16.mxu0 0
    %760 = vmatpush1.bf16.msra.mxu0 0
    %761 = vmatprep.subr.bf16.mxu0 0
    %762 = vmatpush1.bf16.msra.mxu0 0
    %763 = vmatprep.subr.bf16.mxu0 0
    %764 = vmatpush1.bf16.msra.mxu0 0
    %765 = vmatprep.subr.bf16.mxu0 0
    %766 = vmatpush1.bf16.msra.mxu0 0
    %767 = vmatprep.subr.bf16.mxu0 0
    %768 = vmatpush1.bf16.msra.mxu0 0
    %769 = vmatprep.mubr.bf16.mxu0 0
    %770 = vmatmul.mubr.bf16.gmra.mrb[0].mxu0 %v733
    %v771 = vpop.f32.mrb[0].mxu0
    %v772 = vadd.f32 0.0, %v771
    %v773 = vpop.f32.mrb[0].mxu0
    %v774 = vpop.f32.mrb[0].mxu0
    %v775 = vadd.f32 0.0, %v774
    %v776 = vpop.f32.mrb[0].mxu0
    %777 = vmatprep.mubr.bf16.mxu0 0
    %778 = vmatmul.mubr.bf16.gmra.mrb[0].mxu0 %v734
    %v779 = vpop.f32.mrb[0].mxu0
    %v780 = vadd.f32 0.0, %v779
    %v781 = vpop.f32.mrb[0].mxu0
    %v782 = vpop.f32.mrb[0].mxu0
    %v783 = vadd.f32 0.0, %v782
    %v784 = vpop.f32.mrb[0].mxu0
    %785 = vdwg.mxu0
    %v786 = vpack.c.bf16 %v775, %v772
    %v787 = vpack.c.bf16 %v783, %v780
    %s788 = scalar_lea.vmem %s4, 64
    %v789 = vld [vmem:[%s788] sm:$0xf]
    %v790 = vld [vmem:[%s788 + $0x4] sm:$0xf]
    %v791 = vld [vmem:[%s788 + $0x8] sm:$0xf]
    %v792 = vld [vmem:[%s788 + $0xc] sm:$0xf]
    %v797 = vunpack.c.l.b16 %v789
    %v798 = vunpack.c.l.b16 %v790
    %v799 = vunpack.c.l.b16 %v791
    %v800 = vunpack.c.l.b16 %v792
    %v801 = vpack.c.b16 %v798, %v797
    %v802 = vpack.c.b16 %v800, %v799
    %805 = vmatprep.subr.bf16.mxu0 0
    %806 = vmatpush1.bf16.msra.mxu0 %v509
    %807 = vmatprep.subr.bf16.mxu0 0
    %808 = vmatpush1.bf16.msra.mxu0 %v510
    %809 = vmatprep.subr.bf16.mxu0 0
    %810 = vmatpush1.bf16.msra.mxu0 %v511
    %811 = vmatprep.subr.bf16.mxu0 0
    %812 = vmatpush1.bf16.msra.mxu0 %v512
    %813 = vmatprep.subr.bf16.mxu0 0
    %814 = vmatpush1.bf16.msra.mxu0 %v513
    %815 = vmatprep.subr.bf16.mxu0 0
    %816 = vmatpush1.bf16.msra.mxu0 %v514
    %817 = vmatprep.subr.bf16.mxu0 0
    %818 = vmatpush1.bf16.msra.mxu0 %v515
    %819 = vmatprep.subr.bf16.mxu0 0
    %820 = vmatpush1.bf16.msra.mxu0 %v516
    %821 = vmatprep.subr.bf16.mxu0 0
    %822 = vmatpush1.bf16.msra.mxu0 0
    %823 = vmatprep.subr.bf16.mxu0 0
    %824 = vmatpush1.bf16.msra.mxu0 0
    %825 = vmatprep.subr.bf16.mxu0 0
    %826 = vmatpush1.bf16.msra.mxu0 0
    %827 = vmatprep.subr.bf16.mxu0 0
    %828 = vmatpush1.bf16.msra.mxu0 0
    %829 = vmatprep.subr.bf16.mxu0 0
    %830 = vmatpush1.bf16.msra.mxu0 0
    %831 = vmatprep.subr.bf16.mxu0 0
    %832 = vmatpush1.bf16.msra.mxu0 0
    %833 = vmatprep.subr.bf16.mxu0 0
    %834 = vmatpush1.bf16.msra.mxu0 0
    %835 = vmatprep.subr.bf16.mxu0 0
    %836 = vmatpush1.bf16.msra.mxu0 0
    %837 = vmatprep.mubr.bf16.mxu0 0
    %838 = vmatmul.mubr.bf16.gmra.mrb[0].mxu0 %v801
    %v839 = vpop.f32.mrb[0].mxu0
    %v840 = vadd.f32 0.0, %v839
    %v841 = vpop.f32.mrb[0].mxu0
    %v842 = vpop.f32.mrb[0].mxu0
    %v843 = vadd.f32 0.0, %v842
    %v844 = vpop.f32.mrb[0].mxu0
    %845 = vmatprep.mubr.bf16.mxu0 0
    %846 = vmatmul.mubr.bf16.gmra.mrb[0].mxu0 %v802
    %v847 = vpop.f32.mrb[0].mxu0
    %v848 = vadd.f32 0.0, %v847
    %v849 = vpop.f32.mrb[0].mxu0
    %v850 = vpop.f32.mrb[0].mxu0
    %v851 = vadd.f32 0.0, %v850
    %v852 = vpop.f32.mrb[0].mxu0
    %853 = vdwg.mxu0
    %v854 = vpack.c.bf16 %v843, %v840
    %v855 = vpack.c.bf16 %v851, %v848
    %s856 = scalar_lea.vmem %s4, 80
    %v857 = vld [vmem:[%s856] sm:$0xf]
    %v858 = vld [vmem:[%s856 + $0x4] sm:$0xf]
    %v859 = vld [vmem:[%s856 + $0x8] sm:$0xf]
    %v860 = vld [vmem:[%s856 + $0xc] sm:$0xf]
    %v865 = vunpack.c.l.b16 %v857
    %v866 = vunpack.c.l.b16 %v858
    %v867 = vunpack.c.l.b16 %v859
    %v868 = vunpack.c.l.b16 %v860
    %v869 = vpack.c.b16 %v866, %v865
    %v870 = vpack.c.b16 %v868, %v867
    %873 = vmatprep.subr.bf16.mxu0 0
    %874 = vmatpush1.bf16.msra.mxu0 %v509
    %875 = vmatprep.subr.bf16.mxu0 0
    %876 = vmatpush1.bf16.msra.mxu0 %v510
    %877 = vmatprep.subr.bf16.mxu0 0
    %878 = vmatpush1.bf16.msra.mxu0 %v511
    %879 = vmatprep.subr.bf16.mxu0 0
    %880 = vmatpush1.bf16.msra.mxu0 %v512
    %881 = vmatprep.subr.bf16.mxu0 0
    %882 = vmatpush1.bf16.msra.mxu0 %v513
    %883 = vmatprep.subr.bf16.mxu0 0
    %884 = vmatpush1.bf16.msra.mxu0 %v514
    %885 = vmatprep.subr.bf16.mxu0 0
    %886 = vmatpush1.bf16.msra.mxu0 %v515
    %887 = vmatprep.subr.bf16.mxu0 0
    %888 = vmatpush1.bf16.msra.mxu0 %v516
    %889 = vmatprep.subr.bf16.mxu0 0
    %890 = vmatpush1.bf16.msra.mxu0 0
    %891 = vmatprep.subr.bf16.mxu0 0
    %892 = vmatpush1.bf16.msra.mxu0 0
    %893 = vmatprep.subr.bf16.mxu0 0
    %894 = vmatpush1.bf16.msra.mxu0 0
    %895 = vmatprep.subr.bf16.mxu0 0
    %896 = vmatpush1.bf16.msra.mxu0 0
    %897 = vmatprep.subr.bf16.mxu0 0
    %898 = vmatpush1.bf16.msra.mxu0 0
    %899 = vmatprep.subr.bf16.mxu0 0
    %900 = vmatpush1.bf16.msra.mxu0 0
    %901 = vmatprep.subr.bf16.mxu0 0
    %902 = vmatpush1.bf16.msra.mxu0 0
    %903 = vmatprep.subr.bf16.mxu0 0
    %904 = vmatpush1.bf16.msra.mxu0 0
    %905 = vmatprep.mubr.bf16.mxu0 0
    %906 = vmatmul.mubr.bf16.gmra.mrb[0].mxu0 %v869
    %v907 = vpop.f32.mrb[0].mxu0
    %v908 = vadd.f32 0.0, %v907
    %v909 = vpop.f32.mrb[0].mxu0
    %v910 = vpop.f32.mrb[0].mxu0
    %v911 = vadd.f32 0.0, %v910
    %v912 = vpop.f32.mrb[0].mxu0
    %913 = vmatprep.mubr.bf16.mxu0 0
    %914 = vmatmul.mubr.bf16.gmra.mrb[0].mxu0 %v870
    %v915 = vpop.f32.mrb[0].mxu0
    %v916 = vadd.f32 0.0, %v915
    %v917 = vpop.f32.mrb[0].mxu0
    %v918 = vpop.f32.mrb[0].mxu0
    %v919 = vadd.f32 0.0, %v918
    %v920 = vpop.f32.mrb[0].mxu0
    %921 = vdwg.mxu0
    %v922 = vpack.c.bf16 %v911, %v908
    %v923 = vpack.c.bf16 %v919, %v916
    %s924 = scalar_lea.vmem %s4, 96
    %v925 = vld [vmem:[%s924] sm:$0xf]
    %v926 = vld [vmem:[%s924 + $0x4] sm:$0xf]
    %v927 = vld [vmem:[%s924 + $0x8] sm:$0xf]
    %v928 = vld [vmem:[%s924 + $0xc] sm:$0xf]
    %v933 = vunpack.c.l.b16 %v925
    %v934 = vunpack.c.l.b16 %v926
    %v935 = vunpack.c.l.b16 %v927
    %v936 = vunpack.c.l.b16 %v928
    %v937 = vpack.c.b16 %v934, %v933
    %v938 = vpack.c.b16 %v936, %v935
    %941 = vmatprep.subr.bf16.mxu0 0
    %942 = vmatpush1.bf16.msra.mxu0 %v509
    %943 = vmatprep.subr.bf16.mxu0 0
    %944 = vmatpush1.bf16.msra.mxu0 %v510
    %945 = vmatprep.subr.bf16.mxu0 0
    %946 = vmatpush1.bf16.msra.mxu0 %v511
    %947 = vmatprep.subr.bf16.mxu0 0
    %948 = vmatpush1.bf16.msra.mxu0 %v512
    %949 = vmatprep.subr.bf16.mxu0 0
    %950 = vmatpush1.bf16.msra.mxu0 %v513
    %951 = vmatprep.subr.bf16.mxu0 0
    %952 = vmatpush1.bf16.msra.mxu0 %v514
    %953 = vmatprep.subr.bf16.mxu0 0
    %954 = vmatpush1.bf16.msra.mxu0 %v515
    %955 = vmatprep.subr.bf16.mxu0 0
    %956 = vmatpush1.bf16.msra.mxu0 %v516
    %957 = vmatprep.subr.bf16.mxu0 0
    %958 = vmatpush1.bf16.msra.mxu0 0
    %959 = vmatprep.subr.bf16.mxu0 0
    %960 = vmatpush1.bf16.msra.mxu0 0
    %961 = vmatprep.subr.bf16.mxu0 0
    %962 = vmatpush1.bf16.msra.mxu0 0
    %963 = vmatprep.subr.bf16.mxu0 0
    %964 = vmatpush1.bf16.msra.mxu0 0
    %965 = vmatprep.subr.bf16.mxu0 0
    %966 = vmatpush1.bf16.msra.mxu0 0
    %967 = vmatprep.subr.bf16.mxu0 0
    %968 = vmatpush1.bf16.msra.mxu0 0
    %969 = vmatprep.subr.bf16.mxu0 0
    %970 = vmatpush1.bf16.msra.mxu0 0
    %971 = vmatprep.subr.bf16.mxu0 0
    %972 = vmatpush1.bf16.msra.mxu0 0
    %973 = vmatprep.mubr.bf16.mxu0 0
    %974 = vmatmul.mubr.bf16.gmra.mrb[0].mxu0 %v937
    %v975 = vpop.f32.mrb[0].mxu0
    %v976 = vadd.f32 0.0, %v975
    %v977 = vpop.f32.mrb[0].mxu0
    %v978 = vpop.f32.mrb[0].mxu0
    %v979 = vadd.f32 0.0, %v978
    %v980 = vpop.f32.mrb[0].mxu0
    %981 = vmatprep.mubr.bf16.mxu0 0
    %982 = vmatmul.mubr.bf16.gmra.mrb[0].mxu0 %v938
    %v983 = vpop.f32.mrb[0].mxu0
    %v984 = vadd.f32 0.0, %v983
    %v985 = vpop.f32.mrb[0].mxu0
    %v986 = vpop.f32.mrb[0].mxu0
    %v987 = vadd.f32 0.0, %v986
    %v988 = vpop.f32.mrb[0].mxu0
    %989 = vdwg.mxu0
    %v990 = vpack.c.bf16 %v979, %v976
    %v991 = vpack.c.bf16 %v987, %v984
    %s992 = scalar_lea.vmem %s4, 112
    %v993 = vld [vmem:[%s992] sm:$0xf]
    %v994 = vld [vmem:[%s992 + $0x4] sm:$0xf]
    %v995 = vld [vmem:[%s992 + $0x8] sm:$0xf]
    %v996 = vld [vmem:[%s992 + $0xc] sm:$0xf]
    %v1001 = vunpack.c.l.b16 %v993
    %v1002 = vunpack.c.l.b16 %v994
    %v1003 = vunpack.c.l.b16 %v995
    %v1004 = vunpack.c.l.b16 %v996
    %v1005 = vpack.c.b16 %v1002, %v1001
    %v1006 = vpack.c.b16 %v1004, %v1003
    %1009 = vmatprep.subr.bf16.mxu0 0
    %1010 = vmatpush1.bf16.msra.mxu0 %v509
    %1011 = vmatprep.subr.bf16.mxu0 0
    %1012 = vmatpush1.bf16.msra.mxu0 %v510
    %1013 = vmatprep.subr.bf16.mxu0 0
    %1014 = vmatpush1.bf16.msra.mxu0 %v511
    %1015 = vmatprep.subr.bf16.mxu0 0
    %1016 = vmatpush1.bf16.msra.mxu0 %v512
    %1017 = vmatprep.subr.bf16.mxu0 0
    %1018 = vmatpush1.bf16.msra.mxu0 %v513
    %1019 = vmatprep.subr.bf16.mxu0 0
    %1020 = vmatpush1.bf16.msra.mxu0 %v514
    %1021 = vmatprep.subr.bf16.mxu0 0
    %1022 = vmatpush1.bf16.msra.mxu0 %v515
    %1023 = vmatprep.subr.bf16.mxu0 0
    %1024 = vmatpush1.bf16.msra.mxu0 %v516
    %1025 = vmatprep.subr.bf16.mxu0 0
    %1026 = vmatpush1.bf16.msra.mxu0 0
    %1027 = vmatprep.subr.bf16.mxu0 0
    %1028 = vmatpush1.bf16.msra.mxu0 0
    %1029 = vmatprep.subr.bf16.mxu0 0
    %1030 = vmatpush1.bf16.msra.mxu0 0
    %1031 = vmatprep.subr.bf16.mxu0 0
    %1032 = vmatpush1.bf16.msra.mxu0 0
    %1033 = vmatprep.subr.bf16.mxu0 0
    %1034 = vmatpush1.bf16.msra.mxu0 0
    %1035 = vmatprep.subr.bf16.mxu0 0
    %1036 = vmatpush1.bf16.msra.mxu0 0
    %1037 = vmatprep.subr.bf16.mxu0 0
    %1038 = vmatpush1.bf16.msra.mxu0 0
    %1039 = vmatprep.subr.bf16.mxu0 0
    %1040 = vmatpush1.bf16.msra.mxu0 0
    %1041 = vmatprep.mubr.bf16.mxu0 0
    %1042 = vmatmul.mubr.bf16.gmra.mrb[0].mxu0 %v1005
    %v1043 = vpop.f32.mrb[0].mxu0
    %v1044 = vadd.f32 0.0, %v1043
    %v1045 = vpop.f32.mrb[0].mxu0
    %v1046 = vpop.f32.mrb[0].mxu0
    %v1047 = vadd.f32 0.0, %v1046
    %v1048 = vpop.f32.mrb[0].mxu0
    %1049 = vmatprep.mubr.bf16.mxu0 0
    %1050 = vmatmul.mubr.bf16.gmra.mrb[0].mxu0 %v1006
    %v1051 = vpop.f32.mrb[0].mxu0
    %v1052 = vadd.f32 0.0, %v1051
    %v1053 = vpop.f32.mrb[0].mxu0
    %v1054 = vpop.f32.mrb[0].mxu0
    %v1055 = vadd.f32 0.0, %v1054
    %v1056 = vpop.f32.mrb[0].mxu0
    %1057 = vdwg.mxu0
    %v1058 = vpack.c.bf16 %v1047, %v1044
    %v1059 = vpack.c.bf16 %v1055, %v1052
    %s1060 = scalar_lea.vmem %s4, 128
    %v1061 = vld [vmem:[%s1060] sm:$0xf]
    %v1062 = vld [vmem:[%s1060 + $0x4] sm:$0xf]
    %v1063 = vld [vmem:[%s1060 + $0x8] sm:$0xf]
    %v1064 = vld [vmem:[%s1060 + $0xc] sm:$0xf]
    %v1069 = vunpack.c.l.b16 %v1061
    %v1070 = vunpack.c.l.b16 %v1062
    %v1071 = vunpack.c.l.b16 %v1063
    %v1072 = vunpack.c.l.b16 %v1064
    %v1073 = vpack.c.b16 %v1070, %v1069
    %v1074 = vpack.c.b16 %v1072, %v1071
    %1077 = vmatprep.subr.bf16.mxu0 0
    %1078 = vmatpush1.bf16.msra.mxu0 %v509
    %1079 = vmatprep.subr.bf16.mxu0 0
    %1080 = vmatpush1.bf16.msra.mxu0 %v510
    %1081 = vmatprep.subr.bf16.mxu0 0
    %1082 = vmatpush1.bf16.msra.mxu0 %v511
    %1083 = vmatprep.subr.bf16.mxu0 0
    %1084 = vmatpush1.bf16.msra.mxu0 %v512
    %1085 = vmatprep.subr.bf16.mxu0 0
    %1086 = vmatpush1.bf16.msra.mxu0 %v513
    %1087 = vmatprep.subr.bf16.mxu0 0
    %1088 = vmatpush1.bf16.msra.mxu0 %v514
    %1089 = vmatprep.subr.bf16.mxu0 0
    %1090 = vmatpush1.bf16.msra.mxu0 %v515
    %1091 = vmatprep.subr.bf16.mxu0 0
    %1092 = vmatpush1.bf16.msra.mxu0 %v516
    %1093 = vmatprep.subr.bf16.mxu0 0
    %1094 = vmatpush1.bf16.msra.mxu0 0
    %1095 = vmatprep.subr.bf16.mxu0 0
    %1096 = vmatpush1.bf16.msra.mxu0 0
    %1097 = vmatprep.subr.bf16.mxu0 0
    %1098 = vmatpush1.bf16.msra.mxu0 0
    %1099 = vmatprep.subr.bf16.mxu0 0
    %1100 = vmatpush1.bf16.msra.mxu0 0
    %1101 = vmatprep.subr.bf16.mxu0 0
    %1102 = vmatpush1.bf16.msra.mxu0 0
    %1103 = vmatprep.subr.bf16.mxu0 0
    %1104 = vmatpush1.bf16.msra.mxu0 0
    %1105 = vmatprep.subr.bf16.mxu0 0
    %1106 = vmatpush1.bf16.msra.mxu0 0
    %1107 = vmatprep.subr.bf16.mxu0 0
    %1108 = vmatpush1.bf16.msra.mxu0 0
    %1109 = vmatprep.mubr.bf16.mxu0 0
    %1110 = vmatmul.mubr.bf16.gmra.mrb[0].mxu0 %v1073
    %v1111 = vpop.f32.mrb[0].mxu0
    %v1112 = vadd.f32 0.0, %v1111
    %v1113 = vpop.f32.mrb[0].mxu0
    %v1114 = vpop.f32.mrb[0].mxu0
    %v1115 = vadd.f32 0.0, %v1114
    %v1116 = vpop.f32.mrb[0].mxu0
    %1117 = vmatprep.mubr.bf16.mxu0 0
    %1118 = vmatmul.mubr.bf16.gmra.mrb[0].mxu0 %v1074
    %v1119 = vpop.f32.mrb[0].mxu0
    %v1120 = vadd.f32 0.0, %v1119
    %v1121 = vpop.f32.mrb[0].mxu0
    %v1122 = vpop.f32.mrb[0].mxu0
    %v1123 = vadd.f32 0.0, %v1122
    %v1124 = vpop.f32.mrb[0].mxu0
    %1125 = vdwg.mxu0
    %v1126 = vpack.c.bf16 %v1115, %v1112
    %v1127 = vpack.c.bf16 %v1123, %v1120
    %1130 = vrot.lane.b32.xlu0 %v650, 32
    %v1131 = vpop.permute.xlu0 %1130
    %1132 = vrot.lane.b32.xlu0 %v651, 32
    %v1133 = vpop.permute.xlu0 %1132
    %1136 = vrot.lane.b32.xlu0 %v718, 64
    %v1137 = vpop.permute.xlu0 %1136
    %1138 = vrot.lane.b32.xlu0 %v719, 64
    %v1139 = vpop.permute.xlu0 %1138
    %1142 = vrot.lane.b32.xlu0 %v786, 96
    %v1143 = vpop.permute.xlu0 %1142
    %1144 = vrot.lane.b32.xlu0 %v787, 96
    %v1145 = vpop.permute.xlu0 %1144
    %1148 = vrot.lane.b32.xlu0 %v922, 32
    %v1149 = vpop.permute.xlu0 %1148
    %1150 = vrot.lane.b32.xlu0 %v923, 32
    %v1151 = vpop.permute.xlu0 %1150
    %1154 = vrot.lane.b32.xlu0 %v990, 64
    %v1155 = vpop.permute.xlu0 %1154
    %1156 = vrot.lane.b32.xlu0 %v991, 64
    %v1157 = vpop.permute.xlu0 %1156
    %1160 = vrot.lane.b32.xlu0 %v1058, 96
    %v1161 = vpop.permute.xlu0 %1160
    %1162 = vrot.lane.b32.xlu0 %v1059, 96
    %v1163 = vpop.permute.xlu0 %1162
    %v1166 = vsel %vm321, %v582, %v1131
    %v1169 = vsel %vm321, %v583, %v1133
    %vm1170 = vcmask 523264
    %v1172 = vsel %vm1170, %v1166, %v1137
    %v1174 = vsel %vm1170, %v1169, %v1139
    %vm1175 = vcmask 785408
    %v1177 = vsel %vm1175, %v1172, %v1143
    %v1180 = vsel %vm1175, %v1174, %v1145
    %v1184 = vsel %vm321, %v854, %v1149
    %v1187 = vsel %vm321, %v855, %v1151
    %v1189 = vsel %vm1170, %v1184, %v1155
    %v1191 = vsel %vm1170, %v1187, %v1157
    %v1193 = vsel %vm1175, %v1189, %v1161
    %v1196 = vsel %vm1175, %v1191, %v1163
    %v1198 = vld [vmem:[%s5] sm:$0xf]
    %v1199 = vld [vmem:[%s5 + $0x4] sm:$0xf]
    %v1200 = vld [vmem:[%s5 + $0x8] sm:$0xf]
    %v1201 = vld [vmem:[%s5 + $0xc] sm:$0xf]
    %v1202 = vld [vmem:[%s5 + $0x10] sm:$0xf]
    %v1203 = vld [vmem:[%s5 + $0x14] sm:$0xf]
    %v1204 = vld [vmem:[%s5 + $0x18] sm:$0xf]
    %v1205 = vld [vmem:[%s5 + $0x1c] sm:$0xf]
    %v1206 = vld [vmem:[%s5 + $0x20] sm:$0xf]
    %v1207 = vld [vmem:[%s5 + $0x24] sm:$0xf]
    %v1208 = vld [vmem:[%s5 + $0x28] sm:$0xf]
    %v1209 = vld [vmem:[%s5 + $0x2c] sm:$0xf]
    %v1210 = vld [vmem:[%s5 + $0x30] sm:$0xf]
    %v1211 = vld [vmem:[%s5 + $0x34] sm:$0xf]
    %v1212 = vld [vmem:[%s5 + $0x38] sm:$0xf]
    %v1213 = vld [vmem:[%s5 + $0x3c] sm:$0xf]
    %v1214 = vld [vmem:[%s5 + $0x40] sm:$0xf]
    %v1215 = vld [vmem:[%s5 + $0x44] sm:$0xf]
    %v1216 = vld [vmem:[%s5 + $0x48] sm:$0xf]
    %v1217 = vld [vmem:[%s5 + $0x4c] sm:$0xf]
    %v1218 = vld [vmem:[%s5 + $0x50] sm:$0xf]
    %v1219 = vld [vmem:[%s5 + $0x54] sm:$0xf]
    %v1220 = vld [vmem:[%s5 + $0x58] sm:$0xf]
    %v1221 = vld [vmem:[%s5 + $0x5c] sm:$0xf]
    %v1222 = vld [vmem:[%s5 + $0x60] sm:$0xf]
    %v1223 = vld [vmem:[%s5 + $0x64] sm:$0xf]
    %v1224 = vld [vmem:[%s5 + $0x68] sm:$0xf]
    %v1225 = vld [vmem:[%s5 + $0x6c] sm:$0xf]
    %v1226 = vld [vmem:[%s5 + $0x70] sm:$0xf]
    %v1227 = vld [vmem:[%s5 + $0x74] sm:$0xf]
    %v1228 = vld [vmem:[%s5 + $0x78] sm:$0xf]
    %v1229 = vld [vmem:[%s5 + $0x7c] sm:$0xf]
    %v1230 = vld [vmem:[%s5 + $0x80] sm:$0xf]
    %v1231 = vld [vmem:[%s5 + $0x84] sm:$0xf]
    %v1232 = vld [vmem:[%s5 + $0x88] sm:$0xf]
    %v1233 = vld [vmem:[%s5 + $0x8c] sm:$0xf]
    %v1270 = vunpack.c.l.b16 %v1198
    %v1271 = vunpack.c.l.b16 %v1199
    %v1272 = vunpack.c.l.b16 %v1200
    %v1273 = vunpack.c.l.b16 %v1201
    %v1274 = vunpack.c.l.b16 %v1202
    %v1275 = vunpack.c.l.b16 %v1203
    %v1276 = vunpack.c.l.b16 %v1204
    %v1277 = vunpack.c.l.b16 %v1205
    %v1278 = vunpack.c.l.b16 %v1206
    %v1279 = vunpack.c.l.b16 %v1207
    %v1280 = vunpack.c.l.b16 %v1208
    %v1281 = vunpack.c.l.b16 %v1209
    %v1282 = vunpack.c.l.b16 %v1210
    %v1283 = vunpack.c.l.b16 %v1211
    %v1284 = vunpack.c.l.b16 %v1212
    %v1285 = vunpack.c.l.b16 %v1213
    %v1286 = vunpack.c.l.b16 %v1214
    %v1287 = vunpack.c.l.b16 %v1215
    %v1288 = vunpack.c.l.b16 %v1216
    %v1289 = vunpack.c.l.b16 %v1217
    %v1290 = vunpack.c.l.b16 %v1218
    %v1291 = vunpack.c.l.b16 %v1219
    %v1292 = vunpack.c.l.b16 %v1220
    %v1293 = vunpack.c.l.b16 %v1221
    %v1294 = vunpack.c.l.b16 %v1222
    %v1295 = vunpack.c.l.b16 %v1223
    %v1296 = vunpack.c.l.b16 %v1224
    %v1297 = vunpack.c.l.b16 %v1225
    %v1298 = vunpack.c.l.b16 %v1226
    %v1299 = vunpack.c.l.b16 %v1227
    %v1300 = vunpack.c.l.b16 %v1228
    %v1301 = vunpack.c.l.b16 %v1229
    %v1302 = vunpack.c.l.b16 %v1230
    %v1303 = vunpack.c.l.b16 %v1231
    %v1304 = vunpack.c.l.b16 %v1232
    %v1305 = vunpack.c.l.b16 %v1233
    %v1306 = vpack.c.b16 %v1271, %v1270
    %v1307 = vpack.c.b16 %v1273, %v1272
    %v1308 = vpack.c.b16 %v1275, %v1274
    %v1309 = vpack.c.b16 %v1277, %v1276
    %v1310 = vpack.c.b16 %v1279, %v1278
    %v1311 = vpack.c.b16 %v1281, %v1280
    %v1312 = vpack.c.b16 %v1283, %v1282
    %v1313 = vpack.c.b16 %v1285, %v1284
    %v1314 = vpack.c.b16 %v1287, %v1286
    %v1315 = vpack.c.b16 %v1289, %v1288
    %v1316 = vpack.c.b16 %v1291, %v1290
    %v1317 = vpack.c.b16 %v1293, %v1292
    %v1318 = vpack.c.b16 %v1295, %v1294
    %v1319 = vpack.c.b16 %v1297, %v1296
    %v1320 = vpack.c.b16 %v1299, %v1298
    %v1321 = vpack.c.b16 %v1301, %v1300
    %v1322 = vpack.c.b16 %v1303, %v1302
    %v1323 = vpack.c.b16 %v1305, %v1304
    %v1343 = vsel %vm321, %v1126, 0
    %v1346 = vsel %vm321, %v1127, 0
    %1348 = vmatprep.subr.bf16.mxu0 0
    %1349 = vmatpush1.bf16.msra.mxu0 %v1306
    %1350 = vmatprep.subr.bf16.mxu0 0
    %1351 = vmatpush1.bf16.msra.mxu0 %v1307
    %1352 = vmatprep.subr.bf16.mxu0 0
    %1353 = vmatpush1.bf16.msra.mxu0 %v1308
    %1354 = vmatprep.subr.bf16.mxu0 0
    %1355 = vmatpush1.bf16.msra.mxu0 %v1309
    %1356 = vmatprep.subr.bf16.mxu0 0
    %1357 = vmatpush1.bf16.msra.mxu0 %v1310
    %1358 = vmatprep.subr.bf16.mxu0 0
    %1359 = vmatpush1.bf16.msra.mxu0 %v1311
    %1360 = vmatprep.subr.bf16.mxu0 0
    %1361 = vmatpush1.bf16.msra.mxu0 %v1312
    %1362 = vmatprep.subr.bf16.mxu0 0
    %1363 = vmatpush1.bf16.msra.mxu0 %v1313
    %1364 = vmatprep.subr.bf16.mxu0 0
    %1365 = vmatpush1.bf16.msra.mxu0 %v1314
    %1366 = vmatprep.subr.bf16.mxu0 0
    %1367 = vmatpush1.bf16.msra.mxu0 %v1315
    %1368 = vmatprep.subr.bf16.mxu0 0
    %1369 = vmatpush1.bf16.msra.mxu0 %v1316
    %1370 = vmatprep.subr.bf16.mxu0 0
    %1371 = vmatpush1.bf16.msra.mxu0 %v1317
    %1372 = vmatprep.subr.bf16.mxu0 0
    %1373 = vmatpush1.bf16.msra.mxu0 %v1318
    %1374 = vmatprep.subr.bf16.mxu0 0
    %1375 = vmatpush1.bf16.msra.mxu0 %v1319
    %1376 = vmatprep.subr.bf16.mxu0 0
    %1377 = vmatpush1.bf16.msra.mxu0 %v1320
    %1378 = vmatprep.subr.bf16.mxu0 0
    %1379 = vmatpush1.bf16.msra.mxu0 %v1321
    %1380 = vmatprep.mubr.bf16.mxu0 %v1193
    %1381 = vmatmul.mubr.bf16.gmra.mrb[0].mxu0 %v1177
    %v1382 = vpop.f32.mrb[0].mxu0
    %v1383 = vadd.f32 0.0, %v1382
    %v1384 = vpop.f32.mrb[0].mxu0
    %v1385 = vpop.f32.mrb[0].mxu0
    %v1386 = vadd.f32 0.0, %v1385
    %v1387 = vpop.f32.mrb[0].mxu0
    %1388 = vmatprep.mubr.bf16.mxu0 %v1196
    %1389 = vmatmul.mubr.bf16.gmra.mrb[0].mxu0 %v1180
    %v1390 = vpop.f32.mrb[0].mxu0
    %v1391 = vadd.f32 0.0, %v1390
    %v1392 = vpop.f32.mrb[0].mxu0
    %v1393 = vpop.f32.mrb[0].mxu0
    %v1394 = vadd.f32 0.0, %v1393
    %v1395 = vpop.f32.mrb[0].mxu0
    %1396 = vdwg.mxu0
    %1397 = vmatprep.subr.bf16.mxu0 0
    %1398 = vmatpush1.bf16.msra.mxu0 %v1322
    %1399 = vmatprep.subr.bf16.mxu0 0
    %1400 = vmatpush1.bf16.msra.mxu0 %v1323
    %1401 = vmatprep.subr.bf16.mxu0 0
    %1402 = vmatpush1.bf16.msra.mxu0 0
    %1403 = vmatprep.subr.bf16.mxu0 0
    %1404 = vmatpush1.bf16.msra.mxu0 0
    %1405 = vmatprep.subr.bf16.mxu0 0
    %1406 = vmatpush1.bf16.msra.mxu0 0
    %1407 = vmatprep.subr.bf16.mxu0 0
    %1408 = vmatpush1.bf16.msra.mxu0 0
    %1409 = vmatprep.subr.bf16.mxu0 0
    %1410 = vmatpush1.bf16.msra.mxu0 0
    %1411 = vmatprep.subr.bf16.mxu0 0
    %1412 = vmatpush1.bf16.msra.mxu0 0
    %1413 = vmatprep.subr.bf16.mxu0 0
    %1414 = vmatpush1.bf16.msra.mxu0 0
    %1415 = vmatprep.subr.bf16.mxu0 0
    %1416 = vmatpush1.bf16.msra.mxu0 0
    %1417 = vmatprep.subr.bf16.mxu0 0
    %1418 = vmatpush1.bf16.msra.mxu0 0
    %1419 = vmatprep.subr.bf16.mxu0 0
    %1420 = vmatpush1.bf16.msra.mxu0 0
    %1421 = vmatprep.subr.bf16.mxu0 0
    %1422 = vmatpush1.bf16.msra.mxu0 0
    %1423 = vmatprep.subr.bf16.mxu0 0
    %1424 = vmatpush1.bf16.msra.mxu0 0
    %1425 = vmatprep.subr.bf16.mxu0 0
    %1426 = vmatpush1.bf16.msra.mxu0 0
    %1427 = vmatprep.subr.bf16.mxu0 0
    %1428 = vmatpush1.bf16.msra.mxu0 0
    %1429 = vmatprep.mubr.bf16.mxu0 0
    %1430 = vmatmul.mubr.bf16.gmra.mrb[0].mxu0 %v1343
    %v1431 = vpop.f32.mrb[0].mxu0
    %v1432 = vadd.f32 %v1383, %v1431
    %v1433 = vpop.f32.mrb[0].mxu0
    %v1434 = vpop.f32.mrb[0].mxu0
    %v1435 = vadd.f32 %v1386, %v1434
    %v1436 = vpop.f32.mrb[0].mxu0
    %1437 = vmatprep.mubr.bf16.mxu0 0
    %1438 = vmatmul.mubr.bf16.gmra.mrb[0].mxu0 %v1346
    %v1439 = vpop.f32.mrb[0].mxu0
    %v1440 = vadd.f32 %v1391, %v1439
    %v1441 = vpop.f32.mrb[0].mxu0
    %v1442 = vpop.f32.mrb[0].mxu0
    %v1443 = vadd.f32 %v1394, %v1442
    %v1444 = vpop.f32.mrb[0].mxu0
    %1445 = vdwg.mxu0
    %v1446 = vld [vmem:[%s6] sm:$0x1]
    %v1447 = vld [vmem:[%s7] sm:$0x1]
    %v1448 = vsel %vm1170, %v1432, 0.0
    %v1449 = vsel %vm1170, %v1435, 0.0
    %v1450 = vadd.f32 %v1448, %v1449
    %v1451 = vsel %vm1170, %v1440, 0.0
    %v1452 = vadd.f32 %v1450, %v1451
    %v1453 = vsel %vm1170, %v1443, 0.0
    %v1454 = vadd.f32 %v1452, %v1453
    %v1455 = vrot.slane %v1454, 4
    %v1456 = vadd.f32 %v1454, %v1455
    %v1457 = vrot.slane %v1456, 2
    %v1458 = vadd.f32 %v1456, %v1457
    %v1459 = vrot.slane %v1458, 1
    %v1460 = vadd.f32 %v1458, %v1459
    %v1461 = vrcp.pop 32.0
    %v1462 = vmul.f32 %v1460, %v1461
    %v1463 = vsub.f32 %v1432, %v1462
    %v1464 = vsub.f32 %v1435, %v1462
    %v1465 = vsub.f32 %v1440, %v1462
    %v1466 = vsub.f32 %v1443, %v1462
    %v1467 = vmul.f32 %v1463, %v1463
    %v1468 = vmul.f32 %v1464, %v1464
    %v1469 = vmul.f32 %v1465, %v1465
    %v1470 = vmul.f32 %v1466, %v1466
    %v1471 = vsel %vm1170, %v1467, 0.0
    %v1472 = vsel %vm1170, %v1468, 0.0
    %v1473 = vadd.f32 %v1471, %v1472
    %v1474 = vsel %vm1170, %v1469, 0.0
    %v1475 = vadd.f32 %v1473, %v1474
    %v1476 = vsel %vm1170, %v1470, 0.0
    %v1477 = vadd.f32 %v1475, %v1476
    %v1478 = vrot.slane %v1477, 4
    %v1479 = vadd.f32 %v1477, %v1478
    %v1480 = vrot.slane %v1479, 2
    %v1481 = vadd.f32 %v1479, %v1480
    %v1482 = vrot.slane %v1481, 1
    %v1483 = vadd.f32 %v1481, %v1482
    %v1484 = vmul.f32 %v1483, %v1461
    %v1485 = vadd.f32 %v1484, 1e-05
    %v1486 = vrsqrt.pop %v1485
    %v1487 = vmul.f32 %v1463, %v1486
    %v1488 = vmul.f32 %v1464, %v1486
    %v1489 = vmul.f32 %v1465, %v1486
    %v1490 = vmul.f32 %v1466, %v1486
    %v1492 = vlaneseq
    %v1493 = vshrl.u32 %v1492, 7
    %v1494 = vsub.s32 0, %v1493
    %v1495 = vrot.slane %v1446, %v1494
    %v1497 = vmul.f32 %v1487, %v1495
    %v1498 = vmul.f32 %v1488, %v1495
    %v1499 = vmul.f32 %v1489, %v1495
    %v1500 = vmul.f32 %v1490, %v1495
    %v1502 = vlaneseq
    %v1503 = vshrl.u32 %v1502, 7
    %v1504 = vsub.s32 0, %v1503
    %v1505 = vrot.slane %v1447, %v1504
    %v1507 = vadd.f32 %v1497, %v1505
    %v1508 = vadd.f32 %v1498, %v1505
    %v1509 = vadd.f32 %v1499, %v1505
    %v1510 = vadd.f32 %v1500, %v1505
    %v1511 = vmax.f32 %v1507, 0.0
    %v1512 = vmax.f32 %v1508, 0.0
    %v1513 = vmax.f32 %v1509, 0.0
    %v1514 = vmax.f32 %v1510, 0.0
    %v1515 = vsel %vm1170, %v1511, 0.0
    %v1516 = vsel %vm1170, %v1512, 0.0
    %v1517 = vadd.f32 %v1515, %v1516
    %v1518 = vrot.slane %v1517, 4
    %v1519 = vadd.f32 %v1517, %v1518
    %v1520 = vrot.slane %v1519, 2
    %v1521 = vadd.f32 %v1519, %v1520
    %v1522 = vrot.slane %v1521, 1
    %v1523 = vadd.f32 %v1521, %v1522
    %v1524 = vsel %vm1170, %v1513, 0.0
    %v1525 = vsel %vm1170, %v1514, 0.0
    %v1526 = vadd.f32 %v1524, %v1525
    %v1527 = vrot.slane %v1526, 4
    %v1528 = vadd.f32 %v1526, %v1527
    %v1529 = vrot.slane %v1528, 2
    %v1530 = vadd.f32 %v1528, %v1529
    %v1531 = vrot.slane %v1530, 1
    %v1532 = vadd.f32 %v1530, %v1531
    %v1533 = vrcp.pop 16.0
    %v1534 = vmul.f32 %v1523, %v1533
    %v1535 = vmul.f32 %v1532, %v1533
    %v1536 = vpack.c.bf16 %v1534, %v1534
    %v1537 = vpack.c.bf16 %v1535, %v1535
    %v1538 = vld [vmem:[%s8] sm:$0xf]
    %v1539 = vld [vmem:[%s8 + $0x4] sm:$0xf]
    %v1540 = vld [vmem:[%s8 + $0x8] sm:$0xf]
    %v1541 = vld [vmem:[%s8 + $0xc] sm:$0xf]
    %v1542 = vld [vmem:[%s8 + $0x10] sm:$0xf]
    %v1543 = vld [vmem:[%s8 + $0x14] sm:$0xf]
    %v1544 = vld [vmem:[%s8 + $0x18] sm:$0xf]
    %v1545 = vld [vmem:[%s8 + $0x1c] sm:$0xf]
    %v1546 = vld [vmem:[%s9] sm:$0x1]
    %v1548 = vlaneseq
    %v1549 = vshrl.u32 %v1548, 7
    %v1550 = vsub.s32 0, %v1549
    %v1551 = vrot.slane %v1546, %v1550
    %v1555 = vunpack.c.l.b16 %v1536
    %v1556 = vunpack.c.l.b16 %v1537
    %vm1557 = vcmask 1041409
    %v1558 = vsel %vm1557, %v1556, %v1555
    %v1559 = vpack.c.b16 %v1558, %v1558
    %v1568 = vunpack.c.l.b16 %v1538
    %v1569 = vunpack.c.l.b16 %v1539
    %v1570 = vunpack.c.l.b16 %v1540
    %v1571 = vunpack.c.l.b16 %v1541
    %v1572 = vunpack.c.l.b16 %v1542
    %v1573 = vunpack.c.l.b16 %v1543
    %v1574 = vunpack.c.l.b16 %v1544
    %v1575 = vunpack.c.l.b16 %v1545
    %v1576 = vpack.c.b16 %v1569, %v1568
    %v1577 = vpack.c.b16 %v1571, %v1570
    %v1578 = vpack.c.b16 %v1573, %v1572
    %v1579 = vpack.c.b16 %v1575, %v1574
    %v1585 = vsel %vm1170, %v1559, 0
    %1587 = vmatprep.subr.bf16.mxu0 0
    %1588 = vmatpush1.bf16.msra.mxu0 %v1576
    %1589 = vmatprep.subr.bf16.mxu0 0
    %1590 = vmatpush1.bf16.msra.mxu0 %v1577
    %1591 = vmatprep.subr.bf16.mxu0 0
    %1592 = vmatpush1.bf16.msra.mxu0 %v1578
    %1593 = vmatprep.subr.bf16.mxu0 0
    %1594 = vmatpush1.bf16.msra.mxu0 %v1579
    %1595 = vmatprep.subr.bf16.mxu0 0
    %1596 = vmatpush1.bf16.msra.mxu0 0
    %1597 = vmatprep.subr.bf16.mxu0 0
    %1598 = vmatpush1.bf16.msra.mxu0 0
    %1599 = vmatprep.subr.bf16.mxu0 0
    %1600 = vmatpush1.bf16.msra.mxu0 0
    %1601 = vmatprep.subr.bf16.mxu0 0
    %1602 = vmatpush1.bf16.msra.mxu0 0
    %1603 = vmatprep.subr.bf16.mxu0 0
    %1604 = vmatpush1.bf16.msra.mxu0 0
    %1605 = vmatprep.subr.bf16.mxu0 0
    %1606 = vmatpush1.bf16.msra.mxu0 0
    %1607 = vmatprep.subr.bf16.mxu0 0
    %1608 = vmatpush1.bf16.msra.mxu0 0
    %1609 = vmatprep.subr.bf16.mxu0 0
    %1610 = vmatpush1.bf16.msra.mxu0 0
    %1611 = vmatprep.subr.bf16.mxu0 0
    %1612 = vmatpush1.bf16.msra.mxu0 0
    %1613 = vmatprep.subr.bf16.mxu0 0
    %1614 = vmatpush1.bf16.msra.mxu0 0
    %1615 = vmatprep.subr.bf16.mxu0 0
    %1616 = vmatpush1.bf16.msra.mxu0 0
    %1617 = vmatprep.subr.bf16.mxu0 0
    %1618 = vmatpush1.bf16.msra.mxu0 0
    %1619 = vmatprep.mubr.bf16.mxu0 0
    %1620 = vmatmul.mubr.bf16.gmra.mrb[0].mxu0 %v1585
    %v1621 = vpop.f32.mrb[0].mxu0
    %v1622 = vadd.f32 %v1551, %v1621
    %v1623 = vpop.f32.mrb[0].mxu0
    %v1624 = vpop.f32.mrb[0].mxu0
    %v1625 = vpop.f32.mrb[0].mxu0
    %1626 = vdwg.mxu0
    %vm1627 = vcmask 74752
    %1628 = vst.msk [vmem:[#allocation2] sm:$0x3] %vm1627, %v1622
    // Predicated region
    $region42: #{aux_classifier_forward.1} parent=1 // pred_check
      _
    $region43: #{aux_classifier_forward.1} parent=1 // pred_check_branch
      %1630 = sbr.rel (0) target = $region45
    $region44: #{aux_classifier_forward.1} parent=1 // pred_region
      %s1632 = ssub.s32 32, 32
      %1633 = vsyncadd [#allocation3], %s1632
      %s1635 = sshll.u32 [#allocation2], 4
      %s1636 = int_to_ptr.vmem [resolvable:$true] %s1635
      %1638 = dma.vmem_to_hbm [thread:$0]  %s1636, 32, %s10, [#allocation3]
    $region45: #{aux_classifier_forward.1} parent=1 // pred_fallthru
      _
    // Predicated region
    $region46: #{aux_classifier_forward.1} parent=1 // pred_check
      _
    $region47: #{aux_classifier_forward.1} parent=1 // pred_check_branch
      %1640 = sbr.rel (0) target = $region49
    $region48: #{aux_classifier_forward.1} parent=1 // pred_region
      %1641 = dma.done [#allocation3], 32
    $region49: #{aux_classifier_forward.1} parent=1 // pred_fallthru
      _
    %1642 = vsyncpa [#allocation3], 1

</llo_original>
